<compile_context>
chip_gen: v5e
topology: v5e:2x2
jax: 0.10.0
libtpu: 0.0.40
codegen_flags: <defaults>
</compile_context>

<pallas_src>
import jax
import jax.numpy as jnp
from jax import lax
from jax.experimental import pallas as pl
from jax.experimental.pallas import tpu as pltpu

# ---------------- configuration (small, TPU-friendly) ----------------
B = 2              # batch per view
NB = 2 * B         # both views stacked: rows [0:B] = view 1, rows [B:2B] = view 2
C_IN = 4           # input channels
H = W = 16         # spatial
HW = H * W
K = 3              # conv kernel size (stride 1, pad 1)
KC = K * K * C_IN  # 36 im2col lanes
FEAT_DIM = 128     # encoder output dim (stands in for resnet50's 2048)
HIDDEN = 64        # MLP hidden dim (stands in for 512); zero-padded to 128
HPAD = 128         # lane-aligned hidden width used inside the kernel
PROJ = 128         # projection_dim (SimSiam default)
EPS = 1e-5         # BatchNorm1d eps (PyTorch default)


def _simsiam_kernel(patches_ref, pool_ref, convw_ref, w_ref, vec_ref, out_ref):
    # ---- encoder stub: 3x3 conv as ONE lane-dense matmul + ReLU ------------
    feat = jnp.dot(patches_ref[...], convw_ref[...],
                   preferred_element_type=jnp.float32)        # [NB*HW, FEAT] f32
    feat = jnp.maximum(feat, 0.0)

    # ---- global average pool as a bf16 MXU matmul ---------------------------
    f = jnp.dot(pool_ref[...], feat.astype(jnp.bfloat16),
                preferred_element_type=jnp.float32)           # [8, FEAT] f32
    f = f[:NB]                                                # [NB, FEAT]

    vecs = vec_ref[...]                                       # [8, 128] f32

    # hoisted once, reused by all 4 BN call sites
    row_is_v1 = lax.broadcasted_iota(jnp.int32, (NB, HPAD), 0) < B

    def bn_per_view(h, gamma=None, beta=None):
        # training-mode BatchNorm1d (batch mean, biased var, eps=1e-5) with
        # PER-VIEW statistics -> identical to applying the head to x1 and x2
        # in two separate calls, as the PyTorch forward does.
        m1 = jnp.mean(h[:B], axis=0, keepdims=True)
        m2 = jnp.mean(h[B:], axis=0, keepdims=True)
        m = jnp.where(row_is_v1, m1, m2)                      # [NB, HPAD]
        d = h - m
        v1 = jnp.mean(d[:B] * d[:B], axis=0, keepdims=True)
        v2 = jnp.mean(d[B:] * d[B:], axis=0, keepdims=True)
        var = jnp.where(row_is_v1, v1, v2)
        hn = d * lax.rsqrt(var + EPS)
        if gamma is not None:
            hn = hn * gamma + beta
        return hn

    def mm(a, wmat):
        # bf16 MXU operands, f32 accumulation; elementwise math stays f32.
        return jnp.dot(a.astype(jnp.bfloat16), wmat,
                       preferred_element_type=jnp.float32)

    # projector: Linear(no bias) -> BN(affine) -> ReLU -> Linear(no bias) -> BN(affine=False)
    h = mm(f, w_ref[0])                                       # [NB, HPAD]
    h = bn_per_view(h, vecs[0:1], vecs[1:2])
    h = jnp.maximum(h, 0.0)
    z = bn_per_view(mm(h, w_ref[1]))                          # [NB, PROJ]

    # predictor: Linear(bias) -> BN(affine) -> ReLU -> Linear(bias)
    g = mm(z, w_ref[2]) + vecs[2:3]                           # [NB, HPAD]
    g = bn_per_view(g, vecs[3:4], vecs[4:5])
    g = jnp.maximum(g, 0.0)
    p = mm(g, w_ref[3]) + vecs[5:6]                           # [NB, PROJ]

    # pack p1 / z1 / p2 into a single lane/sublane-dense [8,128] slab
    out_ref[...] = jnp.concatenate(
        [p[:B], z[:B], p[B:], jnp.zeros((8 - 3 * B, HPAD), jnp.float32)], axis=0)


def _im2col(x):
    """[NB, C, H, W] f32 -> lane-dense [NB*HW, 128] bf16 patch slab."""
    x = jnp.transpose(x, (0, 2, 3, 1))                        # [NB, H, W, C]
    xp = jnp.pad(x, ((0, 0), (1, 1), (1, 1), (0, 0)))         # [NB, H+2, W+2, C]
    cols = [xp[:, di:di + H, dj:dj + W, :]
            for di in range(K) for dj in range(K)]
    patches = jnp.concatenate(cols, axis=-1)                  # [NB, H, W, 9*C]
    patches = patches.reshape(NB * HW, KC)
    patches = jnp.pad(patches, ((0, 0), (0, HPAD - KC)))      # [NB*HW, 128]
    return patches.astype(jnp.bfloat16)


def simsiam_forward(x1, x2, params):
    """Mirrors SimSiamModelWrapper.forward: returns (p1, z1.detach(), p2, z1.detach())."""
    x = jnp.concatenate([x1, x2], axis=0)                     # [NB, C, H, W]
    patches = _im2col(x)                                      # [NB*HW, 128] bf16

    vmem = pl.BlockSpec(memory_space=pltpu.MemorySpace.VMEM)
    out_shape = jax.ShapeDtypeStruct((8, HPAD), jnp.float32)  # rows: p1,p1,z1,z1,p2,p2,pad,pad
    cost = pl.CostEstimate(flops=36_175_872, transcendentals=2_048,
                           bytes_accessed=450_560)

    out = pl.pallas_call(
        _simsiam_kernel,
        out_shape=out_shape,
        in_specs=[vmem, vmem, vmem, vmem, vmem],
        out_specs=vmem,
        cost_estimate=cost,
    )(patches, params["pool"], params["conv_w"], params["w_slab"], params["vec_slab"])

    p1 = out[0:B]
    z1 = out[B:2 * B]
    p2 = out[2 * B:3 * B]
    z1d = lax.stop_gradient(z1)   # z1.detach()
    return p1, z1d, p2, z1d


def init_params(key):
    ks = jax.random.split(key, 8)
    s = 0.05

    # encoder stub conv weight, packed for the single im2col matmul:
    # per-tap [C_IN, FEAT] -> [K*K*C_IN, FEAT] -> rows zero-padded to 128. Bias-free.
    conv_w = s * jax.random.normal(ks[0], (K * K, C_IN, FEAT_DIM), jnp.float32)
    conv_w = conv_w.reshape(KC, FEAT_DIM)
    conv_w = jnp.pad(conv_w, ((0, HPAD - KC), (0, 0)))        # [128, 128]

    # global-average-pool matrix: [8, NB*HW] bf16, rows >= NB are zero.
    pool = (jnp.arange(NB * HW)[None, :] // HW == jnp.arange(8)[:, None])
    pool = pool.astype(jnp.float32) * (1.0 / HW)              # 1/256 exact in bf16

    proj_w1 = s * jax.random.normal(ks[1], (FEAT_DIM, HIDDEN), jnp.float32)
    proj_w2 = s * jax.random.normal(ks[2], (HIDDEN, PROJ), jnp.float32)
    pred_w1 = s * jax.random.normal(ks[3], (PROJ, HIDDEN), jnp.float32)
    pred_b1 = s * jax.random.normal(ks[4], (HIDDEN,), jnp.float32)
    pred_w2 = s * jax.random.normal(ks[5], (HIDDEN, PROJ), jnp.float32)
    pred_b2 = s * jax.random.normal(ks[6], (PROJ,), jnp.float32)

    # MLP weights packed into one lane-dense bf16 slab; HIDDEN zero-padded to
    # 128 (padded columns/rows are zero, so BN/ReLU/matmul on them stay zero).
    pad_cols = lambda wv: jnp.pad(wv, ((0, 0), (0, HPAD - wv.shape[1])))
    pad_rows = lambda wv: jnp.pad(wv, ((0, HPAD - wv.shape[0]), (0, 0)))
    w_slab = jnp.stack([pad_cols(proj_w1),   # 0: projector Linear 1 (no bias)
                        pad_rows(proj_w2),   # 1: projector Linear 2 (no bias)
                        pad_cols(pred_w1),   # 2: predictor Linear 1
                        pad_rows(pred_w2),   # 3: predictor Linear 2
                        ]).astype(jnp.bfloat16)

    # all per-feature vectors (BN gammas/betas, biases) in one [8, 128] f32 slab
    pad_vec = lambda v: jnp.pad(v, (0, HPAD - v.shape[0]))
    vec_slab = jnp.stack([
        pad_vec(jnp.ones((HIDDEN,), jnp.float32)),    # 0: projector BN gamma
        pad_vec(jnp.zeros((HIDDEN,), jnp.float32)),   # 1: projector BN beta
        pad_vec(pred_b1),                             # 2: predictor bias 1
        pad_vec(jnp.ones((HIDDEN,), jnp.float32)),    # 3: predictor BN gamma
        pad_vec(jnp.zeros((HIDDEN,), jnp.float32)),   # 4: predictor BN beta
        pred_b2,                                      # 5: predictor bias 2
        jnp.zeros((HPAD,), jnp.float32),              # 6: pad (sublane align)
        jnp.zeros((HPAD,), jnp.float32),              # 7: pad (sublane align)
    ])

    return {"conv_w": conv_w.astype(jnp.bfloat16),
            "pool": pool.astype(jnp.bfloat16),
            "w_slab": w_slab,
            "vec_slab": vec_slab}


if __name__ == "__main__":
    key = jax.random.PRNGKey(0)
    kx1, kx2, kp = jax.random.split(key, 3)
    x1 = jax.random.normal(kx1, (B, C_IN, H, W), jnp.float32)  # NCHW, like PyTorch
    x2 = jax.random.normal(kx2, (B, C_IN, H, W), jnp.float32)
    params = init_params(kp)

    p1, z1, p2, z1b = jax.jit(simsiam_forward)(x1, x2, params)
    jax.block_until_ready((p1, z1, p2, z1b))

    assert p1.shape == (B, PROJ) and z1.shape == (B, PROJ) and p2.shape == (B, PROJ)
    assert bool(jnp.all(jnp.isfinite(p1))) and bool(jnp.all(jnp.isfinite(p2)))
    assert bool(jnp.all(jnp.isfinite(z1))) and bool(jnp.all(z1 == z1b))
    print("KERNEL_OK")
</pallas_src>

<mosaic_0001>
module attributes {stable_mosaic.version = 11 : i64} {
  func.func @_simsiam_kernel(%arg0: memref<1024x128xbf16, #tpu.memory_space<vmem>>, %arg1: memref<8x1024xbf16, #tpu.memory_space<vmem>>, %arg2: memref<128x128xbf16, #tpu.memory_space<vmem>>, %arg3: memref<4x128x128xbf16, #tpu.memory_space<vmem>>, %arg4: memref<8x128xf32, #tpu.memory_space<vmem>>, %arg5: memref<8x128xf32, #tpu.memory_space<vmem>>) attributes {dimension_semantics = [], scalar_prefetch = 0 : i64, scratch_operands = 0 : i64, tpu.core_type = #tpu.core_type<tc>} {
    %c0 = arith.constant 0 : index
    %c0_0 = arith.constant 0 : index
    %0 = vector.load %arg0[%c0, %c0_0] : memref<1024x128xbf16, #tpu.memory_space<vmem>>, vector<1024x128xbf16>
    %c0_1 = arith.constant 0 : index
    %c0_2 = arith.constant 0 : index
    %1 = vector.load %arg2[%c0_1, %c0_2] : memref<128x128xbf16, #tpu.memory_space<vmem>>, vector<128x128xbf16>
    %cst = arith.constant dense<0.000000e+00> : vector<1024x128xf32>
    %2 = tpu.matmul %0, %1, %cst {dimension_numbers = #tpu.dot_dimension_numbers<[1], [0], [0], [1], [0, 0, 1, 1], [], []>} : vector<1024x128xbf16>, vector<128x128xbf16>, vector<1024x128xf32> -> vector<1024x128xf32>
    %cst_3 = arith.constant 0.000000e+00 : f32
    %3 = vector.broadcast %cst_3 : f32 to vector<1024x128xf32>
    %4 = arith.maximumf %2, %3 : vector<1024x128xf32>
    %c0_4 = arith.constant 0 : index
    %c0_5 = arith.constant 0 : index
    %5 = vector.load %arg1[%c0_4, %c0_5] : memref<8x1024xbf16, #tpu.memory_space<vmem>>, vector<8x1024xbf16>
    %6 = arith.truncf %4 : vector<1024x128xf32> to vector<1024x128xbf16>
    %cst_6 = arith.constant dense<0.000000e+00> : vector<8x128xf32>
    %7 = tpu.matmul %5, %6, %cst_6 {dimension_numbers = #tpu.dot_dimension_numbers<[1], [0], [0], [1], [0, 0, 1, 1], [], []>} : vector<8x1024xbf16>, vector<1024x128xbf16>, vector<8x128xf32> -> vector<8x128xf32>
    %8 = vector.extract_strided_slice %7 {offsets = [0, 0], sizes = [4, 128], strides = [1, 1]} : vector<8x128xf32> to vector<4x128xf32>
    %c0_7 = arith.constant 0 : index
    %c0_8 = arith.constant 0 : index
    %9 = vector.load %arg4[%c0_7, %c0_8] : memref<8x128xf32, #tpu.memory_space<vmem>>, vector<8x128xf32>
    %10 = tpu.iota {dimensions = array<i32: 0>} : vector<4x128xi32>
    %c2_i32 = arith.constant 2 : i32
    %11 = vector.broadcast %c2_i32 : i32 to vector<4x128xi32>
    %12 = arith.cmpi slt, %10, %11 : vector<4x128xi32>
    %c0_9 = arith.constant 0 : index
    %c0_10 = arith.constant 0 : index
    %c0_11 = arith.constant 0 : index
    %13 = vector.load %arg3[%c0_9, %c0_10, %c0_11] : memref<4x128x128xbf16, #tpu.memory_space<vmem>>, vector<1x128x128xbf16>
    %14 = vector.shape_cast %13 : vector<1x128x128xbf16> to vector<128x128xbf16>
    %15 = arith.truncf %8 : vector<4x128xf32> to vector<4x128xbf16>
    %cst_12 = arith.constant dense<0.000000e+00> : vector<4x128xf32>
    %16 = tpu.matmul %15, %14, %cst_12 {dimension_numbers = #tpu.dot_dimension_numbers<[1], [0], [0], [1], [0, 0, 1, 1], [], []>} : vector<4x128xbf16>, vector<128x128xbf16>, vector<4x128xf32> -> vector<4x128xf32>
    %17 = vector.extract_strided_slice %9 {offsets = [0, 0], sizes = [1, 128], strides = [1, 1]} : vector<8x128xf32> to vector<1x128xf32>
    %18 = vector.extract_strided_slice %9 {offsets = [1, 0], sizes = [1, 128], strides = [1, 1]} : vector<8x128xf32> to vector<1x128xf32>
    %19 = vector.extract_strided_slice %16 {offsets = [0, 0], sizes = [2, 128], strides = [1, 1]} : vector<4x128xf32> to vector<2x128xf32>
    %cst_13 = arith.constant dense<0.000000e+00> : vector<128xf32>
    %20 = vector.multi_reduction <add>, %19, %cst_13 [0] : vector<2x128xf32> to vector<128xf32>
    %21 = vector.shape_cast %20 : vector<128xf32> to vector<1x128xf32>
    %cst_14 = arith.constant 2.000000e+00 : f32
    %22 = vector.broadcast %cst_14 : f32 to vector<1x128xf32>
    %23 = arith.divf %21, %22 : vector<1x128xf32>
    %24 = vector.extract_strided_slice %16 {offsets = [2, 0], sizes = [2, 128], strides = [1, 1]} : vector<4x128xf32> to vector<2x128xf32>
    %cst_15 = arith.constant dense<0.000000e+00> : vector<128xf32>
    %25 = vector.multi_reduction <add>, %24, %cst_15 [0] : vector<2x128xf32> to vector<128xf32>
    %26 = vector.shape_cast %25 : vector<128xf32> to vector<1x128xf32>
    %cst_16 = arith.constant 2.000000e+00 : f32
    %27 = vector.broadcast %cst_16 : f32 to vector<1x128xf32>
    %28 = arith.divf %26, %27 : vector<1x128xf32>
    %29 = vector.shape_cast %23 : vector<1x128xf32> to vector<1x128xf32>
    %30 = vector.broadcast %29 : vector<1x128xf32> to vector<4x128xf32>
    %31 = vector.shape_cast %28 : vector<1x128xf32> to vector<1x128xf32>
    %32 = vector.broadcast %31 : vector<1x128xf32> to vector<4x128xf32>
    %33 = arith.select %12, %30, %32 : vector<4x128xi1>, vector<4x128xf32>
    %34 = arith.subf %16, %33 : vector<4x128xf32>
    %35 = vector.extract_strided_slice %34 {offsets = [0, 0], sizes = [2, 128], strides = [1, 1]} : vector<4x128xf32> to vector<2x128xf32>
    %36 = vector.extract_strided_slice %34 {offsets = [0, 0], sizes = [2, 128], strides = [1, 1]} : vector<4x128xf32> to vector<2x128xf32>
    %37 = arith.mulf %35, %36 : vector<2x128xf32>
    %cst_17 = arith.constant dense<0.000000e+00> : vector<128xf32>
    %38 = vector.multi_reduction <add>, %37, %cst_17 [0] : vector<2x128xf32> to vector<128xf32>
    %39 = vector.shape_cast %38 : vector<128xf32> to vector<1x128xf32>
    %cst_18 = arith.constant 2.000000e+00 : f32
    %40 = vector.broadcast %cst_18 : f32 to vector<1x128xf32>
    %41 = arith.divf %39, %40 : vector<1x128xf32>
    %42 = vector.extract_strided_slice %34 {offsets = [2, 0], sizes = [2, 128], strides = [1, 1]} : vector<4x128xf32> to vector<2x128xf32>
    %43 = vector.extract_strided_slice %34 {offsets = [2, 0], sizes = [2, 128], strides = [1, 1]} : vector<4x128xf32> to vector<2x128xf32>
    %44 = arith.mulf %42, %43 : vector<2x128xf32>
    %cst_19 = arith.constant dense<0.000000e+00> : vector<128xf32>
    %45 = vector.multi_reduction <add>, %44, %cst_19 [0] : vector<2x128xf32> to vector<128xf32>
    %46 = vector.shape_cast %45 : vector<128xf32> to vector<1x128xf32>
    %cst_20 = arith.constant 2.000000e+00 : f32
    %47 = vector.broadcast %cst_20 : f32 to vector<1x128xf32>
    %48 = arith.divf %46, %47 : vector<1x128xf32>
    %49 = vector.shape_cast %41 : vector<1x128xf32> to vector<1x128xf32>
    %50 = vector.broadcast %49 : vector<1x128xf32> to vector<4x128xf32>
    %51 = vector.shape_cast %48 : vector<1x128xf32> to vector<1x128xf32>
    %52 = vector.broadcast %51 : vector<1x128xf32> to vector<4x128xf32>
    %53 = arith.select %12, %50, %52 : vector<4x128xi1>, vector<4x128xf32>
    %cst_21 = arith.constant 9.99999974E-6 : f32
    %54 = vector.broadcast %cst_21 : f32 to vector<4x128xf32>
    %55 = arith.addf %53, %54 : vector<4x128xf32>
    %56 = math.rsqrt %55 : vector<4x128xf32>
    %57 = arith.mulf %34, %56 : vector<4x128xf32>
    %58 = vector.broadcast %17 : vector<1x128xf32> to vector<4x128xf32>
    %59 = arith.mulf %57, %58 : vector<4x128xf32>
    %60 = vector.broadcast %18 : vector<1x128xf32> to vector<4x128xf32>
    %61 = arith.addf %59, %60 : vector<4x128xf32>
    %cst_22 = arith.constant 0.000000e+00 : f32
    %62 = vector.broadcast %cst_22 : f32 to vector<4x128xf32>
    %63 = arith.maximumf %61, %62 : vector<4x128xf32>
    %c1 = arith.constant 1 : index
    %c0_23 = arith.constant 0 : index
    %c0_24 = arith.constant 0 : index
    %64 = vector.load %arg3[%c1, %c0_23, %c0_24] : memref<4x128x128xbf16, #tpu.memory_space<vmem>>, vector<1x128x128xbf16>
    %65 = vector.shape_cast %64 : vector<1x128x128xbf16> to vector<128x128xbf16>
    %66 = arith.truncf %63 : vector<4x128xf32> to vector<4x128xbf16>
    %cst_25 = arith.constant dense<0.000000e+00> : vector<4x128xf32>
    %67 = tpu.matmul %66, %65, %cst_25 {dimension_numbers = #tpu.dot_dimension_numbers<[1], [0], [0], [1], [0, 0, 1, 1], [], []>} : vector<4x128xbf16>, vector<128x128xbf16>, vector<4x128xf32> -> vector<4x128xf32>
    %68 = vector.extract_strided_slice %67 {offsets = [0, 0], sizes = [2, 128], strides = [1, 1]} : vector<4x128xf32> to vector<2x128xf32>
    %cst_26 = arith.constant dense<0.000000e+00> : vector<128xf32>
    %69 = vector.multi_reduction <add>, %68, %cst_26 [0] : vector<2x128xf32> to vector<128xf32>
    %70 = vector.shape_cast %69 : vector<128xf32> to vector<1x128xf32>
    %cst_27 = arith.constant 2.000000e+00 : f32
    %71 = vector.broadcast %cst_27 : f32 to vector<1x128xf32>
    %72 = arith.divf %70, %71 : vector<1x128xf32>
    %73 = vector.extract_strided_slice %67 {offsets = [2, 0], sizes = [2, 128], strides = [1, 1]} : vector<4x128xf32> to vector<2x128xf32>
    %cst_28 = arith.constant dense<0.000000e+00> : vector<128xf32>
    %74 = vector.multi_reduction <add>, %73, %cst_28 [0] : vector<2x128xf32> to vector<128xf32>
    %75 = vector.shape_cast %74 : vector<128xf32> to vector<1x128xf32>
    %cst_29 = arith.constant 2.000000e+00 : f32
    %76 = vector.broadcast %cst_29 : f32 to vector<1x128xf32>
    %77 = arith.divf %75, %76 : vector<1x128xf32>
    %78 = vector.shape_cast %72 : vector<1x128xf32> to vector<1x128xf32>
    %79 = vector.broadcast %78 : vector<1x128xf32> to vector<4x128xf32>
    %80 = vector.shape_cast %77 : vector<1x128xf32> to vector<1x128xf32>
    %81 = vector.broadcast %80 : vector<1x128xf32> to vector<4x128xf32>
    %82 = arith.select %12, %79, %81 : vector<4x128xi1>, vector<4x128xf32>
    %83 = arith.subf %67, %82 : vector<4x128xf32>
    %84 = vector.extract_strided_slice %83 {offsets = [0, 0], sizes = [2, 128], strides = [1, 1]} : vector<4x128xf32> to vector<2x128xf32>
    %85 = vector.extract_strided_slice %83 {offsets = [0, 0], sizes = [2, 128], strides = [1, 1]} : vector<4x128xf32> to vector<2x128xf32>
    %86 = arith.mulf %84, %85 : vector<2x128xf32>
    %cst_30 = arith.constant dense<0.000000e+00> : vector<128xf32>
    %87 = vector.multi_reduction <add>, %86, %cst_30 [0] : vector<2x128xf32> to vector<128xf32>
    %88 = vector.shape_cast %87 : vector<128xf32> to vector<1x128xf32>
    %cst_31 = arith.constant 2.000000e+00 : f32
    %89 = vector.broadcast %cst_31 : f32 to vector<1x128xf32>
    %90 = arith.divf %88, %89 : vector<1x128xf32>
    %91 = vector.extract_strided_slice %83 {offsets = [2, 0], sizes = [2, 128], strides = [1, 1]} : vector<4x128xf32> to vector<2x128xf32>
    %92 = vector.extract_strided_slice %83 {offsets = [2, 0], sizes = [2, 128], strides = [1, 1]} : vector<4x128xf32> to vector<2x128xf32>
    %93 = arith.mulf %91, %92 : vector<2x128xf32>
    %cst_32 = arith.constant dense<0.000000e+00> : vector<128xf32>
    %94 = vector.multi_reduction <add>, %93, %cst_32 [0] : vector<2x128xf32> to vector<128xf32>
    %95 = vector.shape_cast %94 : vector<128xf32> to vector<1x128xf32>
    %cst_33 = arith.constant 2.000000e+00 : f32
    %96 = vector.broadcast %cst_33 : f32 to vector<1x128xf32>
    %97 = arith.divf %95, %96 : vector<1x128xf32>
    %98 = vector.shape_cast %90 : vector<1x128xf32> to vector<1x128xf32>
    %99 = vector.broadcast %98 : vector<1x128xf32> to vector<4x128xf32>
    %100 = vector.shape_cast %97 : vector<1x128xf32> to vector<1x128xf32>
    %101 = vector.broadcast %100 : vector<1x128xf32> to vector<4x128xf32>
    %102 = arith.select %12, %99, %101 : vector<4x128xi1>, vector<4x128xf32>
    %cst_34 = arith.constant 9.99999974E-6 : f32
    %103 = vector.broadcast %cst_34 : f32 to vector<4x128xf32>
    %104 = arith.addf %102, %103 : vector<4x128xf32>
    %105 = math.rsqrt %104 : vector<4x128xf32>
    %106 = arith.mulf %83, %105 : vector<4x128xf32>
    %c2 = arith.constant 2 : index
    %c0_35 = arith.constant 0 : index
    %c0_36 = arith.constant 0 : index
    %107 = vector.load %arg3[%c2, %c0_35, %c0_36] : memref<4x128x128xbf16, #tpu.memory_space<vmem>>, vector<1x128x128xbf16>
    %108 = vector.shape_cast %107 : vector<1x128x128xbf16> to vector<128x128xbf16>
    %109 = arith.truncf %106 : vector<4x128xf32> to vector<4x128xbf16>
    %cst_37 = arith.constant dense<0.000000e+00> : vector<4x128xf32>
    %110 = tpu.matmul %109, %108, %cst_37 {dimension_numbers = #tpu.dot_dimension_numbers<[1], [0], [0], [1], [0, 0, 1, 1], [], []>} : vector<4x128xbf16>, vector<128x128xbf16>, vector<4x128xf32> -> vector<4x128xf32>
    %111 = vector.extract_strided_slice %9 {offsets = [2, 0], sizes = [1, 128], strides = [1, 1]} : vector<8x128xf32> to vector<1x128xf32>
    %112 = vector.broadcast %111 : vector<1x128xf32> to vector<4x128xf32>
    %113 = arith.addf %110, %112 : vector<4x128xf32>
    %114 = vector.extract_strided_slice %9 {offsets = [3, 0], sizes = [1, 128], strides = [1, 1]} : vector<8x128xf32> to vector<1x128xf32>
    %115 = vector.extract_strided_slice %9 {offsets = [4, 0], sizes = [1, 128], strides = [1, 1]} : vector<8x128xf32> to vector<1x128xf32>
    %116 = vector.extract_strided_slice %113 {offsets = [0, 0], sizes = [2, 128], strides = [1, 1]} : vector<4x128xf32> to vector<2x128xf32>
    %cst_38 = arith.constant dense<0.000000e+00> : vector<128xf32>
    %117 = vector.multi_reduction <add>, %116, %cst_38 [0] : vector<2x128xf32> to vector<128xf32>
    %118 = vector.shape_cast %117 : vector<128xf32> to vector<1x128xf32>
    %cst_39 = arith.constant 2.000000e+00 : f32
    %119 = vector.broadcast %cst_39 : f32 to vector<1x128xf32>
    %120 = arith.divf %118, %119 : vector<1x128xf32>
    %121 = vector.extract_strided_slice %113 {offsets = [2, 0], sizes = [2, 128], strides = [1, 1]} : vector<4x128xf32> to vector<2x128xf32>
    %cst_40 = arith.constant dense<0.000000e+00> : vector<128xf32>
    %122 = vector.multi_reduction <add>, %121, %cst_40 [0] : vector<2x128xf32> to vector<128xf32>
    %123 = vector.shape_cast %122 : vector<128xf32> to vector<1x128xf32>
    %cst_41 = arith.constant 2.000000e+00 : f32
    %124 = vector.broadcast %cst_41 : f32 to vector<1x128xf32>
    %125 = arith.divf %123, %124 : vector<1x128xf32>
    %126 = vector.shape_cast %120 : vector<1x128xf32> to vector<1x128xf32>
    %127 = vector.broadcast %126 : vector<1x128xf32> to vector<4x128xf32>
    %128 = vector.shape_cast %125 : vector<1x128xf32> to vector<1x128xf32>
    %129 = vector.broadcast %128 : vector<1x128xf32> to vector<4x128xf32>
    %130 = arith.select %12, %127, %129 : vector<4x128xi1>, vector<4x128xf32>
    %131 = arith.subf %113, %130 : vector<4x128xf32>
    %132 = vector.extract_strided_slice %131 {offsets = [0, 0], sizes = [2, 128], strides = [1, 1]} : vector<4x128xf32> to vector<2x128xf32>
    %133 = vector.extract_strided_slice %131 {offsets = [0, 0], sizes = [2, 128], strides = [1, 1]} : vector<4x128xf32> to vector<2x128xf32>
    %134 = arith.mulf %132, %133 : vector<2x128xf32>
    %cst_42 = arith.constant dense<0.000000e+00> : vector<128xf32>
    %135 = vector.multi_reduction <add>, %134, %cst_42 [0] : vector<2x128xf32> to vector<128xf32>
    %136 = vector.shape_cast %135 : vector<128xf32> to vector<1x128xf32>
    %cst_43 = arith.constant 2.000000e+00 : f32
    %137 = vector.broadcast %cst_43 : f32 to vector<1x128xf32>
    %138 = arith.divf %136, %137 : vector<1x128xf32>
    %139 = vector.extract_strided_slice %131 {offsets = [2, 0], sizes = [2, 128], strides = [1, 1]} : vector<4x128xf32> to vector<2x128xf32>
    %140 = vector.extract_strided_slice %131 {offsets = [2, 0], sizes = [2, 128], strides = [1, 1]} : vector<4x128xf32> to vector<2x128xf32>
    %141 = arith.mulf %139, %140 : vector<2x128xf32>
    %cst_44 = arith.constant dense<0.000000e+00> : vector<128xf32>
    %142 = vector.multi_reduction <add>, %141, %cst_44 [0] : vector<2x128xf32> to vector<128xf32>
    %143 = vector.shape_cast %142 : vector<128xf32> to vector<1x128xf32>
    %cst_45 = arith.constant 2.000000e+00 : f32
    %144 = vector.broadcast %cst_45 : f32 to vector<1x128xf32>
    %145 = arith.divf %143, %144 : vector<1x128xf32>
    %146 = vector.shape_cast %138 : vector<1x128xf32> to vector<1x128xf32>
    %147 = vector.broadcast %146 : vector<1x128xf32> to vector<4x128xf32>
    %148 = vector.shape_cast %145 : vector<1x128xf32> to vector<1x128xf32>
    %149 = vector.broadcast %148 : vector<1x128xf32> to vector<4x128xf32>
    %150 = arith.select %12, %147, %149 : vector<4x128xi1>, vector<4x128xf32>
    %cst_46 = arith.constant 9.99999974E-6 : f32
    %151 = vector.broadcast %cst_46 : f32 to vector<4x128xf32>
    %152 = arith.addf %150, %151 : vector<4x128xf32>
    %153 = math.rsqrt %152 : vector<4x128xf32>
    %154 = arith.mulf %131, %153 : vector<4x128xf32>
    %155 = vector.broadcast %114 : vector<1x128xf32> to vector<4x128xf32>
    %156 = arith.mulf %154, %155 : vector<4x128xf32>
    %157 = vector.broadcast %115 : vector<1x128xf32> to vector<4x128xf32>
    %158 = arith.addf %156, %157 : vector<4x128xf32>
    %cst_47 = arith.constant 0.000000e+00 : f32
    %159 = vector.broadcast %cst_47 : f32 to vector<4x128xf32>
    %160 = arith.maximumf %158, %159 : vector<4x128xf32>
    %c3 = arith.constant 3 : index
    %c0_48 = arith.constant 0 : index
    %c0_49 = arith.constant 0 : index
    %161 = vector.load %arg3[%c3, %c0_48, %c0_49] : memref<4x128x128xbf16, #tpu.memory_space<vmem>>, vector<1x128x128xbf16>
    %162 = vector.shape_cast %161 : vector<1x128x128xbf16> to vector<128x128xbf16>
    %163 = arith.truncf %160 : vector<4x128xf32> to vector<4x128xbf16>
    %cst_50 = arith.constant dense<0.000000e+00> : vector<4x128xf32>
    %164 = tpu.matmul %163, %162, %cst_50 {dimension_numbers = #tpu.dot_dimension_numbers<[1], [0], [0], [1], [0, 0, 1, 1], [], []>} : vector<4x128xbf16>, vector<128x128xbf16>, vector<4x128xf32> -> vector<4x128xf32>
    %165 = vector.extract_strided_slice %9 {offsets = [5, 0], sizes = [1, 128], strides = [1, 1]} : vector<8x128xf32> to vector<1x128xf32>
    %166 = vector.broadcast %165 : vector<1x128xf32> to vector<4x128xf32>
    %167 = arith.addf %164, %166 : vector<4x128xf32>
    %168 = vector.extract_strided_slice %167 {offsets = [0, 0], sizes = [2, 128], strides = [1, 1]} : vector<4x128xf32> to vector<2x128xf32>
    %169 = vector.extract_strided_slice %106 {offsets = [0, 0], sizes = [2, 128], strides = [1, 1]} : vector<4x128xf32> to vector<2x128xf32>
    %170 = vector.extract_strided_slice %167 {offsets = [2, 0], sizes = [2, 128], strides = [1, 1]} : vector<4x128xf32> to vector<2x128xf32>
    %cst_51 = arith.constant 0.000000e+00 : f32
    %171 = vector.broadcast %cst_51 : f32 to vector<2x128xf32>
    %172 = tpu.concatenate %168, %169, %170, %171 in 0 : vector<2x128xf32>, vector<2x128xf32>, vector<2x128xf32>, vector<2x128xf32> -> vector<8x128xf32>
    %c0_52 = arith.constant 0 : index
    %c0_53 = arith.constant 0 : index
    %173 = vector.load %arg5[%c0_52, %c0_53] : memref<8x128xf32, #tpu.memory_space<vmem>>, vector<8x128xf32>
    tpu.vector_store %arg5[%c0_52, %c0_53], %172 {strides = array<i32>} : memref<8x128xf32, #tpu.memory_space<vmem>>, vector<8x128xf32>,
    return
  }
}

</mosaic_0001>

<llo_original>
// kernel: simsiam_forward.1
$region0: #{simsiam_forward.1}
  #allocation0 [shape = 'u32[]', space=smem, size = 0x4, offset = 0x4, fixed_abs, tag = 'smem constant byte address 0x4 - core index']
  #allocation1 [shape = 'u32[72,128]{1,0:T(1,128)}', space=vmem, size = 0x9000, scoped, tag = 'internal scratch']
  %s0 = inlined_call_operand.vmem [shape: bf16[1024,128], index: 0, kind: input, shape index: {}]
  %s1 = inlined_call_operand.vmem [shape: bf16[8,1024], index: 1, kind: input, shape index: {}]
  %s2 = inlined_call_operand.vmem [shape: bf16[128,128], index: 2, kind: input, shape index: {}]
  %s3 = inlined_call_operand.vmem [shape: bf16[4,128,128], index: 3, kind: input, shape index: {}]
  %s4 = inlined_call_operand.vmem [shape: f32[8,128], index: 4, kind: input, shape index: {}]
  %s5 = inlined_call_operand.vmem [shape: f32[8,128], index: 5, kind: output, shape index: {}]
  %s6 = sld [smem:[#allocation0]]
  $region30: #{simsiam_forward.1} parent=0
    _
  %s8 = ssub.s32 1, %s6
  %s9 = scalar_select 0, %s8, %s6
  // Predicated region
  $region2: #{simsiam_forward.1} parent=0 // pred_check
    _
  $region3: #{simsiam_forward.1} parent=0 // pred_check_branch
    %11 = sbr.rel (0) target = $region5
  $region4: #{simsiam_forward.1} parent=0 // pred_region
    _
  $region5: #{simsiam_forward.1} parent=0 // pred_fallthru
    _
  // Predicated region
  $region6: #{simsiam_forward.1} parent=0 // pred_check
    _
  $region7: #{simsiam_forward.1} parent=0 // pred_check_branch
    %13 = sbr.rel (0) target = $region9
  $region8: #{simsiam_forward.1} parent=0 // pred_region
    _
  $region9: #{simsiam_forward.1} parent=0 // pred_fallthru
    _
  // Predicated region
  $region10: #{simsiam_forward.1} parent=0 // pred_check
    _
  $region11: #{simsiam_forward.1} parent=0 // pred_check_branch
    %15 = sbr.rel (0) target = $region13
  $region12: #{simsiam_forward.1} parent=0 // pred_region
    _
  $region13: #{simsiam_forward.1} parent=0 // pred_fallthru
    _
  // Predicated region
  $region14: #{simsiam_forward.1} parent=0 // pred_check
    _
  $region15: #{simsiam_forward.1} parent=0 // pred_check_branch
    %17 = sbr.rel (0) target = $region17
  $region16: #{simsiam_forward.1} parent=0 // pred_region
    _
  $region17: #{simsiam_forward.1} parent=0 // pred_fallthru
    _
  // Predicated region
  $region18: #{simsiam_forward.1} parent=0 // pred_check
    _
  $region19: #{simsiam_forward.1} parent=0 // pred_check_branch
    %19 = sbr.rel (0) target = $region21
  $region20: #{simsiam_forward.1} parent=0 // pred_region
    _
  $region21: #{simsiam_forward.1} parent=0 // pred_fallthru
    _
  %v20 = vld [vmem:[%s0] sm:$0xf]
  %v21 = vld [vmem:[%s0 + $0x4] sm:$0xf]
  %v22 = vld [vmem:[%s0 + $0x8] sm:$0xf]
  %v23 = vld [vmem:[%s0 + $0xc] sm:$0xf]
  %v24 = vld [vmem:[%s0 + $0x10] sm:$0xf]
  %v25 = vld [vmem:[%s0 + $0x14] sm:$0xf]
  %v26 = vld [vmem:[%s0 + $0x18] sm:$0xf]
  %v27 = vld [vmem:[%s0 + $0x1c] sm:$0xf]
  %v28 = vld [vmem:[%s0 + $0x20] sm:$0xf]
  %v29 = vld [vmem:[%s0 + $0x24] sm:$0xf]
  %v30 = vld [vmem:[%s0 + $0x28] sm:$0xf]
  %v31 = vld [vmem:[%s0 + $0x2c] sm:$0xf]
  %v32 = vld [vmem:[%s0 + $0x30] sm:$0xf]
  %v33 = vld [vmem:[%s0 + $0x34] sm:$0xf]
  %v34 = vld [vmem:[%s0 + $0x38] sm:$0xf]
  %v35 = vld [vmem:[%s0 + $0x3c] sm:$0xf]
  %v36 = vld [vmem:[%s0 + $0x40] sm:$0xf]
  %v37 = vld [vmem:[%s0 + $0x44] sm:$0xf]
  %v38 = vld [vmem:[%s0 + $0x48] sm:$0xf]
  %v39 = vld [vmem:[%s0 + $0x4c] sm:$0xf]
  %v40 = vld [vmem:[%s0 + $0x50] sm:$0xf]
  %v41 = vld [vmem:[%s0 + $0x54] sm:$0xf]
  %v42 = vld [vmem:[%s0 + $0x58] sm:$0xf]
  %v43 = vld [vmem:[%s0 + $0x5c] sm:$0xf]
  %v44 = vld [vmem:[%s0 + $0x60] sm:$0xf]
  %v45 = vld [vmem:[%s0 + $0x64] sm:$0xf]
  %v46 = vld [vmem:[%s0 + $0x68] sm:$0xf]
  %v47 = vld [vmem:[%s0 + $0x6c] sm:$0xf]
  %v48 = vld [vmem:[%s0 + $0x70] sm:$0xf]
  %v49 = vld [vmem:[%s0 + $0x74] sm:$0xf]
  %v50 = vld [vmem:[%s0 + $0x78] sm:$0xf]
  %v51 = vld [vmem:[%s0 + $0x7c] sm:$0xf]
  %v52 = vld [vmem:[%s0 + $0x80] sm:$0xf]
  %v53 = vld [vmem:[%s0 + $0x84] sm:$0xf]
  %v54 = vld [vmem:[%s0 + $0x88] sm:$0xf]
  %v55 = vld [vmem:[%s0 + $0x8c] sm:$0xf]
  %v56 = vld [vmem:[%s0 + $0x90] sm:$0xf]
  %v57 = vld [vmem:[%s0 + $0x94] sm:$0xf]
  %v58 = vld [vmem:[%s0 + $0x98] sm:$0xf]
  %v59 = vld [vmem:[%s0 + $0x9c] sm:$0xf]
  %v60 = vld [vmem:[%s0 + $0xa0] sm:$0xf]
  %v61 = vld [vmem:[%s0 + $0xa4] sm:$0xf]
  %v62 = vld [vmem:[%s0 + $0xa8] sm:$0xf]
  %v63 = vld [vmem:[%s0 + $0xac] sm:$0xf]
  %v64 = vld [vmem:[%s0 + $0xb0] sm:$0xf]
  %v65 = vld [vmem:[%s0 + $0xb4] sm:$0xf]
  %v66 = vld [vmem:[%s0 + $0xb8] sm:$0xf]
  %v67 = vld [vmem:[%s0 + $0xbc] sm:$0xf]
  %v68 = vld [vmem:[%s0 + $0xc0] sm:$0xf]
  %v69 = vld [vmem:[%s0 + $0xc4] sm:$0xf]
  %v70 = vld [vmem:[%s0 + $0xc8] sm:$0xf]
  %v71 = vld [vmem:[%s0 + $0xcc] sm:$0xf]
  %v72 = vld [vmem:[%s0 + $0xd0] sm:$0xf]
  %v73 = vld [vmem:[%s0 + $0xd4] sm:$0xf]
  %v74 = vld [vmem:[%s0 + $0xd8] sm:$0xf]
  %v75 = vld [vmem:[%s0 + $0xdc] sm:$0xf]
  %v76 = vld [vmem:[%s0 + $0xe0] sm:$0xf]
  %v77 = vld [vmem:[%s0 + $0xe4] sm:$0xf]
  %v78 = vld [vmem:[%s0 + $0xe8] sm:$0xf]
  %v79 = vld [vmem:[%s0 + $0xec] sm:$0xf]
  %v80 = vld [vmem:[%s0 + $0xf0] sm:$0xf]
  %v81 = vld [vmem:[%s0 + $0xf4] sm:$0xf]
  %v82 = vld [vmem:[%s0 + $0xf8] sm:$0xf]
  %v83 = vld [vmem:[%s0 + $0xfc] sm:$0xf]
  %v84 = vld [vmem:[%s0 + $0x100] sm:$0xf]
  %v85 = vld [vmem:[%s0 + $0x104] sm:$0xf]
  %v86 = vld [vmem:[%s0 + $0x108] sm:$0xf]
  %v87 = vld [vmem:[%s0 + $0x10c] sm:$0xf]
  %v88 = vld [vmem:[%s0 + $0x110] sm:$0xf]
  %v89 = vld [vmem:[%s0 + $0x114] sm:$0xf]
  %v90 = vld [vmem:[%s0 + $0x118] sm:$0xf]
  %v91 = vld [vmem:[%s0 + $0x11c] sm:$0xf]
  %v92 = vld [vmem:[%s0 + $0x120] sm:$0xf]
  %v93 = vld [vmem:[%s0 + $0x124] sm:$0xf]
  %v94 = vld [vmem:[%s0 + $0x128] sm:$0xf]
  %v95 = vld [vmem:[%s0 + $0x12c] sm:$0xf]
  %v96 = vld [vmem:[%s0 + $0x130] sm:$0xf]
  %v97 = vld [vmem:[%s0 + $0x134] sm:$0xf]
  %v98 = vld [vmem:[%s0 + $0x138] sm:$0xf]
  %v99 = vld [vmem:[%s0 + $0x13c] sm:$0xf]
  %v100 = vld [vmem:[%s0 + $0x140] sm:$0xf]
  %v101 = vld [vmem:[%s0 + $0x144] sm:$0xf]
  %v102 = vld [vmem:[%s0 + $0x148] sm:$0xf]
  %v103 = vld [vmem:[%s0 + $0x14c] sm:$0xf]
  %v104 = vld [vmem:[%s0 + $0x150] sm:$0xf]
  %v105 = vld [vmem:[%s0 + $0x154] sm:$0xf]
  %v106 = vld [vmem:[%s0 + $0x158] sm:$0xf]
  %v107 = vld [vmem:[%s0 + $0x15c] sm:$0xf]
  %v108 = vld [vmem:[%s0 + $0x160] sm:$0xf]
  %v109 = vld [vmem:[%s0 + $0x164] sm:$0xf]
  %v110 = vld [vmem:[%s0 + $0x168] sm:$0xf]
  %v111 = vld [vmem:[%s0 + $0x16c] sm:$0xf]
  %v112 = vld [vmem:[%s0 + $0x170] sm:$0xf]
  %v113 = vld [vmem:[%s0 + $0x174] sm:$0xf]
  %v114 = vld [vmem:[%s0 + $0x178] sm:$0xf]
  %v115 = vld [vmem:[%s0 + $0x17c] sm:$0xf]
  %v116 = vld [vmem:[%s0 + $0x180] sm:$0xf]
  %v117 = vld [vmem:[%s0 + $0x184] sm:$0xf]
  %v118 = vld [vmem:[%s0 + $0x188] sm:$0xf]
  %v119 = vld [vmem:[%s0 + $0x18c] sm:$0xf]
  %v120 = vld [vmem:[%s0 + $0x190] sm:$0xf]
  %v121 = vld [vmem:[%s0 + $0x194] sm:$0xf]
  %v122 = vld [vmem:[%s0 + $0x198] sm:$0xf]
  %v123 = vld [vmem:[%s0 + $0x19c] sm:$0xf]
  %v124 = vld [vmem:[%s0 + $0x1a0] sm:$0xf]
  %v125 = vld [vmem:[%s0 + $0x1a4] sm:$0xf]
  %v126 = vld [vmem:[%s0 + $0x1a8] sm:$0xf]
  %v127 = vld [vmem:[%s0 + $0x1ac] sm:$0xf]
  %v128 = vld [vmem:[%s0 + $0x1b0] sm:$0xf]
  %v129 = vld [vmem:[%s0 + $0x1b4] sm:$0xf]
  %v130 = vld [vmem:[%s0 + $0x1b8] sm:$0xf]
  %v131 = vld [vmem:[%s0 + $0x1bc] sm:$0xf]
  %v132 = vld [vmem:[%s0 + $0x1c0] sm:$0xf]
  %v133 = vld [vmem:[%s0 + $0x1c4] sm:$0xf]
  %v134 = vld [vmem:[%s0 + $0x1c8] sm:$0xf]
  %v135 = vld [vmem:[%s0 + $0x1cc] sm:$0xf]
  %v136 = vld [vmem:[%s0 + $0x1d0] sm:$0xf]
  %v137 = vld [vmem:[%s0 + $0x1d4] sm:$0xf]
  %v138 = vld [vmem:[%s0 + $0x1d8] sm:$0xf]
  %v139 = vld [vmem:[%s0 + $0x1dc] sm:$0xf]
  %v140 = vld [vmem:[%s0 + $0x1e0] sm:$0xf]
  %v141 = vld [vmem:[%s0 + $0x1e4] sm:$0xf]
  %v142 = vld [vmem:[%s0 + $0x1e8] sm:$0xf]
  %v143 = vld [vmem:[%s0 + $0x1ec] sm:$0xf]
  %v144 = vld [vmem:[%s0 + $0x1f0] sm:$0xf]
  %v145 = vld [vmem:[%s0 + $0x1f4] sm:$0xf]
  %v146 = vld [vmem:[%s0 + $0x1f8] sm:$0xf]
  %v147 = vld [vmem:[%s0 + $0x1fc] sm:$0xf]
  %v148 = vld [vmem:[%s2] sm:$0xf]
  %v149 = vld [vmem:[%s2 + $0x4] sm:$0xf]
  %v150 = vld [vmem:[%s2 + $0x8] sm:$0xf]
  %v151 = vld [vmem:[%s2 + $0xc] sm:$0xf]
  %v152 = vld [vmem:[%s2 + $0x10] sm:$0xf]
  %v153 = vld [vmem:[%s2 + $0x14] sm:$0xf]
  %v154 = vld [vmem:[%s2 + $0x18] sm:$0xf]
  %v155 = vld [vmem:[%s2 + $0x1c] sm:$0xf]
  %v156 = vld [vmem:[%s2 + $0x20] sm:$0xf]
  %v157 = vld [vmem:[%s2 + $0x24] sm:$0xf]
  %v158 = vld [vmem:[%s2 + $0x28] sm:$0xf]
  %v159 = vld [vmem:[%s2 + $0x2c] sm:$0xf]
  %v160 = vld [vmem:[%s2 + $0x30] sm:$0xf]
  %v161 = vld [vmem:[%s2 + $0x34] sm:$0xf]
  %v162 = vld [vmem:[%s2 + $0x38] sm:$0xf]
  %v163 = vld [vmem:[%s2 + $0x3c] sm:$0xf]
  %v292 = vunpack.c.l.b16 %v20
  %v293 = vunpack.c.l.b16 %v21
  %v294 = vunpack.c.l.b16 %v22
  %v295 = vunpack.c.l.b16 %v23
  %v296 = vunpack.c.l.b16 %v24
  %v297 = vunpack.c.l.b16 %v25
  %v298 = vunpack.c.l.b16 %v26
  %v299 = vunpack.c.l.b16 %v27
  %v300 = vunpack.c.l.b16 %v28
  %v301 = vunpack.c.l.b16 %v29
  %v302 = vunpack.c.l.b16 %v30
  %v303 = vunpack.c.l.b16 %v31
  %v304 = vunpack.c.l.b16 %v32
  %v305 = vunpack.c.l.b16 %v33
  %v306 = vunpack.c.l.b16 %v34
  %v307 = vunpack.c.l.b16 %v35
  %v308 = vunpack.c.l.b16 %v36
  %v309 = vunpack.c.l.b16 %v37
  %v310 = vunpack.c.l.b16 %v38
  %v311 = vunpack.c.l.b16 %v39
  %v312 = vunpack.c.l.b16 %v40
  %v313 = vunpack.c.l.b16 %v41
  %v314 = vunpack.c.l.b16 %v42
  %v315 = vunpack.c.l.b16 %v43
  %v316 = vunpack.c.l.b16 %v44
  %v317 = vunpack.c.l.b16 %v45
  %v318 = vunpack.c.l.b16 %v46
  %v319 = vunpack.c.l.b16 %v47
  %v320 = vunpack.c.l.b16 %v48
  %v321 = vunpack.c.l.b16 %v49
  %v322 = vunpack.c.l.b16 %v50
  %v323 = vunpack.c.l.b16 %v51
  %v324 = vunpack.c.l.b16 %v52
  %v325 = vunpack.c.l.b16 %v53
  %v326 = vunpack.c.l.b16 %v54
  %v327 = vunpack.c.l.b16 %v55
  %v328 = vunpack.c.l.b16 %v56
  %v329 = vunpack.c.l.b16 %v57
  %v330 = vunpack.c.l.b16 %v58
  %v331 = vunpack.c.l.b16 %v59
  %v332 = vunpack.c.l.b16 %v60
  %v333 = vunpack.c.l.b16 %v61
  %v334 = vunpack.c.l.b16 %v62
  %v335 = vunpack.c.l.b16 %v63
  %v336 = vunpack.c.l.b16 %v64
  %v337 = vunpack.c.l.b16 %v65
  %v338 = vunpack.c.l.b16 %v66
  %v339 = vunpack.c.l.b16 %v67
  %v340 = vunpack.c.l.b16 %v68
  %v341 = vunpack.c.l.b16 %v69
  %v342 = vunpack.c.l.b16 %v70
  %v343 = vunpack.c.l.b16 %v71
  %v344 = vunpack.c.l.b16 %v72
  %v345 = vunpack.c.l.b16 %v73
  %v346 = vunpack.c.l.b16 %v74
  %v347 = vunpack.c.l.b16 %v75
  %v348 = vunpack.c.l.b16 %v76
  %v349 = vunpack.c.l.b16 %v77
  %v350 = vunpack.c.l.b16 %v78
  %v351 = vunpack.c.l.b16 %v79
  %v352 = vunpack.c.l.b16 %v80
  %v353 = vunpack.c.l.b16 %v81
  %v354 = vunpack.c.l.b16 %v82
  %v355 = vunpack.c.l.b16 %v83
  %v356 = vunpack.c.l.b16 %v84
  %v357 = vunpack.c.l.b16 %v85
  %v358 = vunpack.c.l.b16 %v86
  %v359 = vunpack.c.l.b16 %v87
  %v360 = vunpack.c.l.b16 %v88
  %v361 = vunpack.c.l.b16 %v89
  %v362 = vunpack.c.l.b16 %v90
  %v363 = vunpack.c.l.b16 %v91
  %v364 = vunpack.c.l.b16 %v92
  %v365 = vunpack.c.l.b16 %v93
  %v366 = vunpack.c.l.b16 %v94
  %v367 = vunpack.c.l.b16 %v95
  %v368 = vunpack.c.l.b16 %v96
  %v369 = vunpack.c.l.b16 %v97
  %v370 = vunpack.c.l.b16 %v98
  %v371 = vunpack.c.l.b16 %v99
  %v372 = vunpack.c.l.b16 %v100
  %v373 = vunpack.c.l.b16 %v101
  %v374 = vunpack.c.l.b16 %v102
  %v375 = vunpack.c.l.b16 %v103
  %v376 = vunpack.c.l.b16 %v104
  %v377 = vunpack.c.l.b16 %v105
  %v378 = vunpack.c.l.b16 %v106
  %v379 = vunpack.c.l.b16 %v107
  %v380 = vunpack.c.l.b16 %v108
  %v381 = vunpack.c.l.b16 %v109
  %v382 = vunpack.c.l.b16 %v110
  %v383 = vunpack.c.l.b16 %v111
  %v384 = vunpack.c.l.b16 %v112
  %v385 = vunpack.c.l.b16 %v113
  %v386 = vunpack.c.l.b16 %v114
  %v387 = vunpack.c.l.b16 %v115
  %v388 = vunpack.c.l.b16 %v116
  %v389 = vunpack.c.l.b16 %v117
  %v390 = vunpack.c.l.b16 %v118
  %v391 = vunpack.c.l.b16 %v119
  %v392 = vunpack.c.l.b16 %v120
  %v393 = vunpack.c.l.b16 %v121
  %v394 = vunpack.c.l.b16 %v122
  %v395 = vunpack.c.l.b16 %v123
  %v396 = vunpack.c.l.b16 %v124
  %v397 = vunpack.c.l.b16 %v125
  %v398 = vunpack.c.l.b16 %v126
  %v399 = vunpack.c.l.b16 %v127
  %v400 = vunpack.c.l.b16 %v128
  %v401 = vunpack.c.l.b16 %v129
  %v402 = vunpack.c.l.b16 %v130
  %v403 = vunpack.c.l.b16 %v131
  %v404 = vunpack.c.l.b16 %v132
  %v405 = vunpack.c.l.b16 %v133
  %v406 = vunpack.c.l.b16 %v134
  %v407 = vunpack.c.l.b16 %v135
  %v408 = vunpack.c.l.b16 %v136
  %v409 = vunpack.c.l.b16 %v137
  %v410 = vunpack.c.l.b16 %v138
  %v411 = vunpack.c.l.b16 %v139
  %v412 = vunpack.c.l.b16 %v140
  %v413 = vunpack.c.l.b16 %v141
  %v414 = vunpack.c.l.b16 %v142
  %v415 = vunpack.c.l.b16 %v143
  %v416 = vunpack.c.l.b16 %v144
  %v417 = vunpack.c.l.b16 %v145
  %v418 = vunpack.c.l.b16 %v146
  %v419 = vunpack.c.l.b16 %v147
  %v420 = vpack.c.b16 %v293, %v292
  %v421 = vpack.c.b16 %v295, %v294
  %v422 = vpack.c.b16 %v297, %v296
  %v423 = vpack.c.b16 %v299, %v298
  %v424 = vpack.c.b16 %v301, %v300
  %v425 = vpack.c.b16 %v303, %v302
  %v426 = vpack.c.b16 %v305, %v304
  %v427 = vpack.c.b16 %v307, %v306
  %v428 = vpack.c.b16 %v309, %v308
  %v429 = vpack.c.b16 %v311, %v310
  %v430 = vpack.c.b16 %v313, %v312
  %v431 = vpack.c.b16 %v315, %v314
  %v432 = vpack.c.b16 %v317, %v316
  %v433 = vpack.c.b16 %v319, %v318
  %v434 = vpack.c.b16 %v321, %v320
  %v435 = vpack.c.b16 %v323, %v322
  %v436 = vpack.c.b16 %v325, %v324
  %v437 = vpack.c.b16 %v327, %v326
  %v438 = vpack.c.b16 %v329, %v328
  %v439 = vpack.c.b16 %v331, %v330
  %v440 = vpack.c.b16 %v333, %v332
  %v441 = vpack.c.b16 %v335, %v334
  %v442 = vpack.c.b16 %v337, %v336
  %v443 = vpack.c.b16 %v339, %v338
  %v444 = vpack.c.b16 %v341, %v340
  %v445 = vpack.c.b16 %v343, %v342
  %v446 = vpack.c.b16 %v345, %v344
  %v447 = vpack.c.b16 %v347, %v346
  %v448 = vpack.c.b16 %v349, %v348
  %v449 = vpack.c.b16 %v351, %v350
  %v450 = vpack.c.b16 %v353, %v352
  %v451 = vpack.c.b16 %v355, %v354
  %v452 = vpack.c.b16 %v357, %v356
  %v453 = vpack.c.b16 %v359, %v358
  %v454 = vpack.c.b16 %v361, %v360
  %v455 = vpack.c.b16 %v363, %v362
  %v456 = vpack.c.b16 %v365, %v364
  %v457 = vpack.c.b16 %v367, %v366
  %v458 = vpack.c.b16 %v369, %v368
  %v459 = vpack.c.b16 %v371, %v370
  %v460 = vpack.c.b16 %v373, %v372
  %v461 = vpack.c.b16 %v375, %v374
  %v462 = vpack.c.b16 %v377, %v376
  %v463 = vpack.c.b16 %v379, %v378
  %v464 = vpack.c.b16 %v381, %v380
  %v465 = vpack.c.b16 %v383, %v382
  %v466 = vpack.c.b16 %v385, %v384
  %v467 = vpack.c.b16 %v387, %v386
  %v468 = vpack.c.b16 %v389, %v388
  %v469 = vpack.c.b16 %v391, %v390
  %v470 = vpack.c.b16 %v393, %v392
  %v471 = vpack.c.b16 %v395, %v394
  %v472 = vpack.c.b16 %v397, %v396
  %v473 = vpack.c.b16 %v399, %v398
  %v474 = vpack.c.b16 %v401, %v400
  %v475 = vpack.c.b16 %v403, %v402
  %v476 = vpack.c.b16 %v405, %v404
  %v477 = vpack.c.b16 %v407, %v406
  %v478 = vpack.c.b16 %v409, %v408
  %v479 = vpack.c.b16 %v411, %v410
  %v480 = vpack.c.b16 %v413, %v412
  %v481 = vpack.c.b16 %v415, %v414
  %v482 = vpack.c.b16 %v417, %v416
  %v483 = vpack.c.b16 %v419, %v418
  %v564 = vunpack.c.l.b16 %v148
  %v565 = vunpack.c.l.b16 %v149
  %v566 = vunpack.c.l.b16 %v150
  %v567 = vunpack.c.l.b16 %v151
  %v568 = vunpack.c.l.b16 %v152
  %v569 = vunpack.c.l.b16 %v153
  %v570 = vunpack.c.l.b16 %v154
  %v571 = vunpack.c.l.b16 %v155
  %v572 = vunpack.c.l.b16 %v156
  %v573 = vunpack.c.l.b16 %v157
  %v574 = vunpack.c.l.b16 %v158
  %v575 = vunpack.c.l.b16 %v159
  %v576 = vunpack.c.l.b16 %v160
  %v577 = vunpack.c.l.b16 %v161
  %v578 = vunpack.c.l.b16 %v162
  %v579 = vunpack.c.l.b16 %v163
  %v580 = vpack.c.b16 %v565, %v564
  %v581 = vpack.c.b16 %v567, %v566
  %v582 = vpack.c.b16 %v569, %v568
  %v583 = vpack.c.b16 %v571, %v570
  %v584 = vpack.c.b16 %v573, %v572
  %v585 = vpack.c.b16 %v575, %v574
  %v586 = vpack.c.b16 %v577, %v576
  %v587 = vpack.c.b16 %v579, %v578
  %596 = vmatpush.bf16.msra.mxu0 %v587
  %597 = vmatpush.bf16.msra.mxu0 %v586
  %598 = vmatpush.bf16.msra.mxu0 %v585
  %599 = vmatpush.bf16.msra.mxu0 %v584
  %600 = vmatpush.bf16.msra.mxu0 %v583
  %601 = vmatpush.bf16.msra.mxu0 %v582
  %602 = vmatpush.bf16.msra.mxu0 %v581
  %603 = vmatpush.bf16.msra.mxu0 %v580
  %604 = vmatmul.bf16.gmra.mxu0 %v420
  %v605 = vpop.f32.mrf.mxu0
  %v606 = vadd.f32 0.0, %v605
  %v607 = vpop.f32.mrf.mxu0
  %v608 = vadd.f32 0.0, %v607
  %609 = vmatmul.bf16.gmra.mxu0 %v421
  %v610 = vpop.f32.mrf.mxu0
  %v611 = vadd.f32 0.0, %v610
  %v612 = vpop.f32.mrf.mxu0
  %v613 = vadd.f32 0.0, %v612
  %614 = vmatmul.bf16.gmra.mxu0 %v422
  %v615 = vpop.f32.mrf.mxu0
  %v616 = vadd.f32 0.0, %v615
  %v617 = vpop.f32.mrf.mxu0
  %v618 = vadd.f32 0.0, %v617
  %619 = vmatmul.bf16.gmra.mxu0 %v423
  %v620 = vpop.f32.mrf.mxu0
  %v621 = vadd.f32 0.0, %v620
  %v622 = vpop.f32.mrf.mxu0
  %v623 = vadd.f32 0.0, %v622
  %624 = vmatmul.bf16.gmra.mxu0 %v424
  %v625 = vpop.f32.mrf.mxu0
  %v626 = vadd.f32 0.0, %v625
  %v627 = vpop.f32.mrf.mxu0
  %v628 = vadd.f32 0.0, %v627
  %629 = vmatmul.bf16.gmra.mxu0 %v425
  %v630 = vpop.f32.mrf.mxu0
  %v631 = vadd.f32 0.0, %v630
  %v632 = vpop.f32.mrf.mxu0
  %v633 = vadd.f32 0.0, %v632
  %634 = vmatmul.bf16.gmra.mxu0 %v426
  %v635 = vpop.f32.mrf.mxu0
  %v636 = vadd.f32 0.0, %v635
  %v637 = vpop.f32.mrf.mxu0
  %v638 = vadd.f32 0.0, %v637
  %639 = vmatmul.bf16.gmra.mxu0 %v427
  %v640 = vpop.f32.mrf.mxu0
  %v641 = vadd.f32 0.0, %v640
  %v642 = vpop.f32.mrf.mxu0
  %v643 = vadd.f32 0.0, %v642
  %644 = vmatmul.bf16.gmra.mxu0 %v428
  %v645 = vpop.f32.mrf.mxu0
  %v646 = vadd.f32 0.0, %v645
  %v647 = vpop.f32.mrf.mxu0
  %v648 = vadd.f32 0.0, %v647
  %649 = vmatmul.bf16.gmra.mxu0 %v429
  %v650 = vpop.f32.mrf.mxu0
  %v651 = vadd.f32 0.0, %v650
  %v652 = vpop.f32.mrf.mxu0
  %v653 = vadd.f32 0.0, %v652
  %654 = vmatmul.bf16.gmra.mxu0 %v430
  %v655 = vpop.f32.mrf.mxu0
  %v656 = vadd.f32 0.0, %v655
  %v657 = vpop.f32.mrf.mxu0
  %v658 = vadd.f32 0.0, %v657
  %659 = vmatmul.bf16.gmra.mxu0 %v431
  %v660 = vpop.f32.mrf.mxu0
  %v661 = vadd.f32 0.0, %v660
  %v662 = vpop.f32.mrf.mxu0
  %v663 = vadd.f32 0.0, %v662
  %664 = vmatmul.bf16.gmra.mxu0 %v432
  %v665 = vpop.f32.mrf.mxu0
  %v666 = vadd.f32 0.0, %v665
  %v667 = vpop.f32.mrf.mxu0
  %v668 = vadd.f32 0.0, %v667
  %669 = vmatmul.bf16.gmra.mxu0 %v433
  %v670 = vpop.f32.mrf.mxu0
  %v671 = vadd.f32 0.0, %v670
  %v672 = vpop.f32.mrf.mxu0
  %v673 = vadd.f32 0.0, %v672
  %674 = vmatmul.bf16.gmra.mxu0 %v434
  %v675 = vpop.f32.mrf.mxu0
  %v676 = vadd.f32 0.0, %v675
  %v677 = vpop.f32.mrf.mxu0
  %v678 = vadd.f32 0.0, %v677
  %679 = vmatmul.bf16.gmra.mxu0 %v435
  %v680 = vpop.f32.mrf.mxu0
  %v681 = vadd.f32 0.0, %v680
  %v682 = vpop.f32.mrf.mxu0
  %v683 = vadd.f32 0.0, %v682
  %684 = vmatmul.bf16.gmra.mxu0 %v436
  %v685 = vpop.f32.mrf.mxu0
  %v686 = vadd.f32 0.0, %v685
  %v687 = vpop.f32.mrf.mxu0
  %v688 = vadd.f32 0.0, %v687
  %689 = vmatmul.bf16.gmra.mxu0 %v437
  %v690 = vpop.f32.mrf.mxu0
  %v691 = vadd.f32 0.0, %v690
  %v692 = vpop.f32.mrf.mxu0
  %v693 = vadd.f32 0.0, %v692
  %694 = vmatmul.bf16.gmra.mxu0 %v438
  %v695 = vpop.f32.mrf.mxu0
  %v696 = vadd.f32 0.0, %v695
  %v697 = vpop.f32.mrf.mxu0
  %v698 = vadd.f32 0.0, %v697
  %699 = vmatmul.bf16.gmra.mxu0 %v439
  %v700 = vpop.f32.mrf.mxu0
  %v701 = vadd.f32 0.0, %v700
  %v702 = vpop.f32.mrf.mxu0
  %v703 = vadd.f32 0.0, %v702
  %704 = vmatmul.bf16.gmra.mxu0 %v440
  %v705 = vpop.f32.mrf.mxu0
  %v706 = vadd.f32 0.0, %v705
  %v707 = vpop.f32.mrf.mxu0
  %v708 = vadd.f32 0.0, %v707
  %709 = vmatmul.bf16.gmra.mxu0 %v441
  %v710 = vpop.f32.mrf.mxu0
  %v711 = vadd.f32 0.0, %v710
  %v712 = vpop.f32.mrf.mxu0
  %v713 = vadd.f32 0.0, %v712
  %714 = vmatmul.bf16.gmra.mxu0 %v442
  %v715 = vpop.f32.mrf.mxu0
  %v716 = vadd.f32 0.0, %v715
  %v717 = vpop.f32.mrf.mxu0
  %v718 = vadd.f32 0.0, %v717
  %719 = vmatmul.bf16.gmra.mxu0 %v443
  %v720 = vpop.f32.mrf.mxu0
  %v721 = vadd.f32 0.0, %v720
  %v722 = vpop.f32.mrf.mxu0
  %v723 = vadd.f32 0.0, %v722
  %724 = vmatmul.bf16.gmra.mxu0 %v444
  %v725 = vpop.f32.mrf.mxu0
  %v726 = vadd.f32 0.0, %v725
  %v727 = vpop.f32.mrf.mxu0
  %v728 = vadd.f32 0.0, %v727
  %729 = vmatmul.bf16.gmra.mxu0 %v445
  %v730 = vpop.f32.mrf.mxu0
  %v731 = vadd.f32 0.0, %v730
  %v732 = vpop.f32.mrf.mxu0
  %v733 = vadd.f32 0.0, %v732
  %734 = vmatmul.bf16.gmra.mxu0 %v446
  %v735 = vpop.f32.mrf.mxu0
  %v736 = vadd.f32 0.0, %v735
  %v737 = vpop.f32.mrf.mxu0
  %v738 = vadd.f32 0.0, %v737
  %739 = vmatmul.bf16.gmra.mxu0 %v447
  %v740 = vpop.f32.mrf.mxu0
  %v741 = vadd.f32 0.0, %v740
  %v742 = vpop.f32.mrf.mxu0
  %v743 = vadd.f32 0.0, %v742
  %744 = vmatmul.bf16.gmra.mxu0 %v448
  %v745 = vpop.f32.mrf.mxu0
  %v746 = vadd.f32 0.0, %v745
  %v747 = vpop.f32.mrf.mxu0
  %v748 = vadd.f32 0.0, %v747
  %749 = vmatmul.bf16.gmra.mxu0 %v449
  %v750 = vpop.f32.mrf.mxu0
  %v751 = vadd.f32 0.0, %v750
  %v752 = vpop.f32.mrf.mxu0
  %v753 = vadd.f32 0.0, %v752
  %754 = vmatmul.bf16.gmra.mxu0 %v450
  %v755 = vpop.f32.mrf.mxu0
  %v756 = vadd.f32 0.0, %v755
  %v757 = vpop.f32.mrf.mxu0
  %v758 = vadd.f32 0.0, %v757
  %759 = vmatmul.bf16.gmra.mxu0 %v451
  %v760 = vpop.f32.mrf.mxu0
  %v761 = vadd.f32 0.0, %v760
  %v762 = vpop.f32.mrf.mxu0
  %v763 = vadd.f32 0.0, %v762
  %764 = vmatmul.bf16.gmra.mxu0 %v452
  %v765 = vpop.f32.mrf.mxu0
  %v766 = vadd.f32 0.0, %v765
  %v767 = vpop.f32.mrf.mxu0
  %v768 = vadd.f32 0.0, %v767
  %769 = vmatmul.bf16.gmra.mxu0 %v453
  %v770 = vpop.f32.mrf.mxu0
  %v771 = vadd.f32 0.0, %v770
  %v772 = vpop.f32.mrf.mxu0
  %v773 = vadd.f32 0.0, %v772
  %774 = vmatmul.bf16.gmra.mxu0 %v454
  %v775 = vpop.f32.mrf.mxu0
  %v776 = vadd.f32 0.0, %v775
  %v777 = vpop.f32.mrf.mxu0
  %v778 = vadd.f32 0.0, %v777
  %779 = vmatmul.bf16.gmra.mxu0 %v455
  %v780 = vpop.f32.mrf.mxu0
  %v781 = vadd.f32 0.0, %v780
  %v782 = vpop.f32.mrf.mxu0
  %v783 = vadd.f32 0.0, %v782
  %784 = vmatmul.bf16.gmra.mxu0 %v456
  %v785 = vpop.f32.mrf.mxu0
  %v786 = vadd.f32 0.0, %v785
  %v787 = vpop.f32.mrf.mxu0
  %v788 = vadd.f32 0.0, %v787
  %789 = vmatmul.bf16.gmra.mxu0 %v457
  %v790 = vpop.f32.mrf.mxu0
  %v791 = vadd.f32 0.0, %v790
  %v792 = vpop.f32.mrf.mxu0
  %v793 = vadd.f32 0.0, %v792
  %794 = vmatmul.bf16.gmra.mxu0 %v458
  %v795 = vpop.f32.mrf.mxu0
  %v796 = vadd.f32 0.0, %v795
  %v797 = vpop.f32.mrf.mxu0
  %v798 = vadd.f32 0.0, %v797
  %799 = vmatmul.bf16.gmra.mxu0 %v459
  %v800 = vpop.f32.mrf.mxu0
  %v801 = vadd.f32 0.0, %v800
  %v802 = vpop.f32.mrf.mxu0
  %v803 = vadd.f32 0.0, %v802
  %804 = vmatmul.bf16.gmra.mxu0 %v460
  %v805 = vpop.f32.mrf.mxu0
  %v806 = vadd.f32 0.0, %v805
  %v807 = vpop.f32.mrf.mxu0
  %v808 = vadd.f32 0.0, %v807
  %809 = vmatmul.bf16.gmra.mxu0 %v461
  %v810 = vpop.f32.mrf.mxu0
  %v811 = vadd.f32 0.0, %v810
  %v812 = vpop.f32.mrf.mxu0
  %v813 = vadd.f32 0.0, %v812
  %814 = vmatmul.bf16.gmra.mxu0 %v462
  %v815 = vpop.f32.mrf.mxu0
  %v816 = vadd.f32 0.0, %v815
  %v817 = vpop.f32.mrf.mxu0
  %v818 = vadd.f32 0.0, %v817
  %819 = vmatmul.bf16.gmra.mxu0 %v463
  %v820 = vpop.f32.mrf.mxu0
  %v821 = vadd.f32 0.0, %v820
  %v822 = vpop.f32.mrf.mxu0
  %v823 = vadd.f32 0.0, %v822
  %824 = vmatmul.bf16.gmra.mxu0 %v464
  %v825 = vpop.f32.mrf.mxu0
  %v826 = vadd.f32 0.0, %v825
  %v827 = vpop.f32.mrf.mxu0
  %v828 = vadd.f32 0.0, %v827
  %829 = vmatmul.bf16.gmra.mxu0 %v465
  %v830 = vpop.f32.mrf.mxu0
  %v831 = vadd.f32 0.0, %v830
  %v832 = vpop.f32.mrf.mxu0
  %v833 = vadd.f32 0.0, %v832
  %834 = vmatmul.bf16.gmra.mxu0 %v466
  %v835 = vpop.f32.mrf.mxu0
  %v836 = vadd.f32 0.0, %v835
  %v837 = vpop.f32.mrf.mxu0
  %v838 = vadd.f32 0.0, %v837
  %839 = vmatmul.bf16.gmra.mxu0 %v467
  %v840 = vpop.f32.mrf.mxu0
  %v841 = vadd.f32 0.0, %v840
  %v842 = vpop.f32.mrf.mxu0
  %v843 = vadd.f32 0.0, %v842
  %844 = vmatmul.bf16.gmra.mxu0 %v468
  %v845 = vpop.f32.mrf.mxu0
  %v846 = vadd.f32 0.0, %v845
  %v847 = vpop.f32.mrf.mxu0
  %v848 = vadd.f32 0.0, %v847
  %849 = vmatmul.bf16.gmra.mxu0 %v469
  %v850 = vpop.f32.mrf.mxu0
  %v851 = vadd.f32 0.0, %v850
  %v852 = vpop.f32.mrf.mxu0
  %v853 = vadd.f32 0.0, %v852
  %854 = vmatmul.bf16.gmra.mxu0 %v470
  %v855 = vpop.f32.mrf.mxu0
  %v856 = vadd.f32 0.0, %v855
  %v857 = vpop.f32.mrf.mxu0
  %v858 = vadd.f32 0.0, %v857
  %859 = vmatmul.bf16.gmra.mxu0 %v471
  %v860 = vpop.f32.mrf.mxu0
  %v861 = vadd.f32 0.0, %v860
  %v862 = vpop.f32.mrf.mxu0
  %v863 = vadd.f32 0.0, %v862
  %864 = vmatmul.bf16.gmra.mxu0 %v472
  %v865 = vpop.f32.mrf.mxu0
  %v866 = vadd.f32 0.0, %v865
  %v867 = vpop.f32.mrf.mxu0
  %v868 = vadd.f32 0.0, %v867
  %869 = vmatmul.bf16.gmra.mxu0 %v473
  %v870 = vpop.f32.mrf.mxu0
  %v871 = vadd.f32 0.0, %v870
  %v872 = vpop.f32.mrf.mxu0
  %v873 = vadd.f32 0.0, %v872
  %874 = vmatmul.bf16.gmra.mxu0 %v474
  %v875 = vpop.f32.mrf.mxu0
  %v876 = vadd.f32 0.0, %v875
  %v877 = vpop.f32.mrf.mxu0
  %v878 = vadd.f32 0.0, %v877
  %879 = vmatmul.bf16.gmra.mxu0 %v475
  %v880 = vpop.f32.mrf.mxu0
  %v881 = vadd.f32 0.0, %v880
  %v882 = vpop.f32.mrf.mxu0
  %v883 = vadd.f32 0.0, %v882
  %884 = vmatmul.bf16.gmra.mxu0 %v476
  %v885 = vpop.f32.mrf.mxu0
  %v886 = vadd.f32 0.0, %v885
  %v887 = vpop.f32.mrf.mxu0
  %v888 = vadd.f32 0.0, %v887
  %889 = vmatmul.bf16.gmra.mxu0 %v477
  %v890 = vpop.f32.mrf.mxu0
  %v891 = vadd.f32 0.0, %v890
  %v892 = vpop.f32.mrf.mxu0
  %v893 = vadd.f32 0.0, %v892
  %894 = vmatmul.bf16.gmra.mxu0 %v478
  %v895 = vpop.f32.mrf.mxu0
  %v896 = vadd.f32 0.0, %v895
  %v897 = vpop.f32.mrf.mxu0
  %v898 = vadd.f32 0.0, %v897
  %899 = vmatmul.bf16.gmra.mxu0 %v479
  %v900 = vpop.f32.mrf.mxu0
  %v901 = vadd.f32 0.0, %v900
  %v902 = vpop.f32.mrf.mxu0
  %v903 = vadd.f32 0.0, %v902
  %904 = vmatmul.bf16.gmra.mxu0 %v480
  %v905 = vpop.f32.mrf.mxu0
  %v906 = vadd.f32 0.0, %v905
  %v907 = vpop.f32.mrf.mxu0
  %v908 = vadd.f32 0.0, %v907
  %909 = vmatmul.bf16.gmra.mxu0 %v481
  %v910 = vpop.f32.mrf.mxu0
  %v911 = vadd.f32 0.0, %v910
  %v912 = vpop.f32.mrf.mxu0
  %v913 = vadd.f32 0.0, %v912
  %914 = vmatmul.bf16.gmra.mxu0 %v482
  %v915 = vpop.f32.mrf.mxu0
  %v916 = vadd.f32 0.0, %v915
  %v917 = vpop.f32.mrf.mxu0
  %v918 = vadd.f32 0.0, %v917
  %919 = vmatmul.bf16.gmra.mxu0 %v483
  %v920 = vpop.f32.mrf.mxu0
  %v921 = vadd.f32 0.0, %v920
  %v922 = vpop.f32.mrf.mxu0
  %v923 = vadd.f32 0.0, %v922
  %924 = vdwg.mxu0
  %v925 = vmax.f32 %v606, 0.0
  %v926 = vmax.f32 %v608, 0.0
  %v927 = vmax.f32 %v611, 0.0
  %v928 = vmax.f32 %v613, 0.0
  %v929 = vmax.f32 %v616, 0.0
  %v930 = vmax.f32 %v618, 0.0
  %v931 = vmax.f32 %v621, 0.0
  %v932 = vmax.f32 %v623, 0.0
  %v933 = vmax.f32 %v626, 0.0
  %v934 = vmax.f32 %v628, 0.0
  %v935 = vmax.f32 %v631, 0.0
  %v936 = vmax.f32 %v633, 0.0
  %v937 = vmax.f32 %v636, 0.0
  %v938 = vmax.f32 %v638, 0.0
  %v939 = vmax.f32 %v641, 0.0
  %v940 = vmax.f32 %v643, 0.0
  %v941 = vmax.f32 %v646, 0.0
  %v942 = vmax.f32 %v648, 0.0
  %v943 = vmax.f32 %v651, 0.0
  %v944 = vmax.f32 %v653, 0.0
  %v945 = vmax.f32 %v656, 0.0
  %v946 = vmax.f32 %v658, 0.0
  %v947 = vmax.f32 %v661, 0.0
  %v948 = vmax.f32 %v663, 0.0
  %v949 = vmax.f32 %v666, 0.0
  %v950 = vmax.f32 %v668, 0.0
  %v951 = vmax.f32 %v671, 0.0
  %v952 = vmax.f32 %v673, 0.0
  %v953 = vmax.f32 %v676, 0.0
  %v954 = vmax.f32 %v678, 0.0
  %v955 = vmax.f32 %v681, 0.0
  %v956 = vmax.f32 %v683, 0.0
  %v957 = vmax.f32 %v686, 0.0
  %v958 = vmax.f32 %v688, 0.0
  %v959 = vmax.f32 %v691, 0.0
  %v960 = vmax.f32 %v693, 0.0
  %v961 = vmax.f32 %v696, 0.0
  %v962 = vmax.f32 %v698, 0.0
  %v963 = vmax.f32 %v701, 0.0
  %v964 = vmax.f32 %v703, 0.0
  %v965 = vmax.f32 %v706, 0.0
  %v966 = vmax.f32 %v708, 0.0
  %v967 = vmax.f32 %v711, 0.0
  %v968 = vmax.f32 %v713, 0.0
  %v969 = vmax.f32 %v716, 0.0
  %v970 = vmax.f32 %v718, 0.0
  %v971 = vmax.f32 %v721, 0.0
  %v972 = vmax.f32 %v723, 0.0
  %v973 = vmax.f32 %v726, 0.0
  %v974 = vmax.f32 %v728, 0.0
  %v975 = vmax.f32 %v731, 0.0
  %v976 = vmax.f32 %v733, 0.0
  %v977 = vmax.f32 %v736, 0.0
  %v978 = vmax.f32 %v738, 0.0
  %v979 = vmax.f32 %v741, 0.0
  %v980 = vmax.f32 %v743, 0.0
  %v981 = vmax.f32 %v746, 0.0
  %v982 = vmax.f32 %v748, 0.0
  %v983 = vmax.f32 %v751, 0.0
  %v984 = vmax.f32 %v753, 0.0
  %v985 = vmax.f32 %v756, 0.0
  %v986 = vmax.f32 %v758, 0.0
  %v987 = vmax.f32 %v761, 0.0
  %v988 = vmax.f32 %v763, 0.0
  %v989 = vmax.f32 %v766, 0.0
  %v990 = vmax.f32 %v768, 0.0
  %v991 = vmax.f32 %v771, 0.0
  %v992 = vmax.f32 %v773, 0.0
  %v993 = vmax.f32 %v776, 0.0
  %v994 = vmax.f32 %v778, 0.0
  %v995 = vmax.f32 %v781, 0.0
  %v996 = vmax.f32 %v783, 0.0
  %v997 = vmax.f32 %v786, 0.0
  %v998 = vmax.f32 %v788, 0.0
  %v999 = vmax.f32 %v791, 0.0
  %v1000 = vmax.f32 %v793, 0.0
  %v1001 = vmax.f32 %v796, 0.0
  %v1002 = vmax.f32 %v798, 0.0
  %v1003 = vmax.f32 %v801, 0.0
  %v1004 = vmax.f32 %v803, 0.0
  %v1005 = vmax.f32 %v806, 0.0
  %v1006 = vmax.f32 %v808, 0.0
  %v1007 = vmax.f32 %v811, 0.0
  %v1008 = vmax.f32 %v813, 0.0
  %v1009 = vmax.f32 %v816, 0.0
  %v1010 = vmax.f32 %v818, 0.0
  %v1011 = vmax.f32 %v821, 0.0
  %v1012 = vmax.f32 %v823, 0.0
  %v1013 = vmax.f32 %v826, 0.0
  %v1014 = vmax.f32 %v828, 0.0
  %v1015 = vmax.f32 %v831, 0.0
  %v1016 = vmax.f32 %v833, 0.0
  %v1017 = vmax.f32 %v836, 0.0
  %v1018 = vmax.f32 %v838, 0.0
  %v1019 = vmax.f32 %v841, 0.0
  %v1020 = vmax.f32 %v843, 0.0
  %v1021 = vmax.f32 %v846, 0.0
  %v1022 = vmax.f32 %v848, 0.0
  %v1023 = vmax.f32 %v851, 0.0
  %v1024 = vmax.f32 %v853, 0.0
  %v1025 = vmax.f32 %v856, 0.0
  %v1026 = vmax.f32 %v858, 0.0
  %v1027 = vmax.f32 %v861, 0.0
  %v1028 = vmax.f32 %v863, 0.0
  %v1029 = vmax.f32 %v866, 0.0
  %v1030 = vmax.f32 %v868, 0.0
  %v1031 = vmax.f32 %v871, 0.0
  %v1032 = vmax.f32 %v873, 0.0
  %v1033 = vmax.f32 %v876, 0.0
  %v1034 = vmax.f32 %v878, 0.0
  %v1035 = vmax.f32 %v881, 0.0
  %v1036 = vmax.f32 %v883, 0.0
  %v1037 = vmax.f32 %v886, 0.0
  %v1038 = vmax.f32 %v888, 0.0
  %v1039 = vmax.f32 %v891, 0.0
  %v1040 = vmax.f32 %v893, 0.0
  %v1041 = vmax.f32 %v896, 0.0
  %v1042 = vmax.f32 %v898, 0.0
  %v1043 = vmax.f32 %v901, 0.0
  %v1044 = vmax.f32 %v903, 0.0
  %v1045 = vmax.f32 %v906, 0.0
  %v1046 = vmax.f32 %v908, 0.0
  %v1047 = vmax.f32 %v911, 0.0
  %v1048 = vmax.f32 %v913, 0.0
  %v1049 = vmax.f32 %v916, 0.0
  %v1050 = vmax.f32 %v918, 0.0
  %v1051 = vmax.f32 %v921, 0.0
  %v1052 = vmax.f32 %v923, 0.0
  %v1053 = vld [vmem:[%s1] sm:$0xff]
  %v1054 = vld [vmem:[%s1 + $0x8] sm:$0xff]
  %v1055 = vld [vmem:[%s1 + $0x10] sm:$0xff]
  %v1056 = vld [vmem:[%s1 + $0x18] sm:$0xff]
  %v1057 = vpack.c.bf16 %v926, %v925
  %v1058 = vpack.c.bf16 %v928, %v927
  %v1059 = vpack.c.bf16 %v930, %v929
  %v1060 = vpack.c.bf16 %v932, %v931
  %v1061 = vpack.c.bf16 %v934, %v933
  %v1062 = vpack.c.bf16 %v936, %v935
  %v1063 = vpack.c.bf16 %v938, %v937
  %v1064 = vpack.c.bf16 %v940, %v939
  %v1065 = vpack.c.bf16 %v942, %v941
  %v1066 = vpack.c.bf16 %v944, %v943
  %v1067 = vpack.c.bf16 %v946, %v945
  %v1068 = vpack.c.bf16 %v948, %v947
  %v1069 = vpack.c.bf16 %v950, %v949
  %v1070 = vpack.c.bf16 %v952, %v951
  %v1071 = vpack.c.bf16 %v954, %v953
  %v1072 = vpack.c.bf16 %v956, %v955
  %v1073 = vpack.c.bf16 %v958, %v957
  %v1074 = vpack.c.bf16 %v960, %v959
  %v1075 = vpack.c.bf16 %v962, %v961
  %v1076 = vpack.c.bf16 %v964, %v963
  %v1077 = vpack.c.bf16 %v966, %v965
  %v1078 = vpack.c.bf16 %v968, %v967
  %v1079 = vpack.c.bf16 %v970, %v969
  %v1080 = vpack.c.bf16 %v972, %v971
  %v1081 = vpack.c.bf16 %v974, %v973
  %v1082 = vpack.c.bf16 %v976, %v975
  %v1083 = vpack.c.bf16 %v978, %v977
  %v1084 = vpack.c.bf16 %v980, %v979
  %v1085 = vpack.c.bf16 %v982, %v981
  %v1086 = vpack.c.bf16 %v984, %v983
  %v1087 = vpack.c.bf16 %v986, %v985
  %v1088 = vpack.c.bf16 %v988, %v987
  %v1089 = vpack.c.bf16 %v990, %v989
  %v1090 = vpack.c.bf16 %v992, %v991
  %v1091 = vpack.c.bf16 %v994, %v993
  %v1092 = vpack.c.bf16 %v996, %v995
  %v1093 = vpack.c.bf16 %v998, %v997
  %v1094 = vpack.c.bf16 %v1000, %v999
  %v1095 = vpack.c.bf16 %v1002, %v1001
  %v1096 = vpack.c.bf16 %v1004, %v1003
  %v1097 = vpack.c.bf16 %v1006, %v1005
  %v1098 = vpack.c.bf16 %v1008, %v1007
  %v1099 = vpack.c.bf16 %v1010, %v1009
  %v1100 = vpack.c.bf16 %v1012, %v1011
  %v1101 = vpack.c.bf16 %v1014, %v1013
  %v1102 = vpack.c.bf16 %v1016, %v1015
  %v1103 = vpack.c.bf16 %v1018, %v1017
  %v1104 = vpack.c.bf16 %v1020, %v1019
  %v1105 = vpack.c.bf16 %v1022, %v1021
  %v1106 = vpack.c.bf16 %v1024, %v1023
  %v1107 = vpack.c.bf16 %v1026, %v1025
  %v1108 = vpack.c.bf16 %v1028, %v1027
  %v1109 = vpack.c.bf16 %v1030, %v1029
  %v1110 = vpack.c.bf16 %v1032, %v1031
  %v1111 = vpack.c.bf16 %v1034, %v1033
  %v1112 = vpack.c.bf16 %v1036, %v1035
  %v1113 = vpack.c.bf16 %v1038, %v1037
  %v1114 = vpack.c.bf16 %v1040, %v1039
  %v1115 = vpack.c.bf16 %v1042, %v1041
  %v1116 = vpack.c.bf16 %v1044, %v1043
  %v1117 = vpack.c.bf16 %v1046, %v1045
  %v1118 = vpack.c.bf16 %v1048, %v1047
  %v1119 = vpack.c.bf16 %v1050, %v1049
  %v1120 = vpack.c.bf16 %v1052, %v1051
  %v1125 = vunpack.c.l.b16 %v1053
  %v1126 = vunpack.c.h.b16 %v1053
  %v1127 = vunpack.c.l.b16 %v1054
  %v1128 = vunpack.c.h.b16 %v1054
  %v1129 = vunpack.c.l.b16 %v1055
  %v1130 = vunpack.c.h.b16 %v1055
  %v1131 = vunpack.c.l.b16 %v1056
  %v1132 = vunpack.c.h.b16 %v1056
  %v1133 = vpack.c.b16 %v1125, %v1125
  %v1134 = vpack.c.b16 %v1126, %v1126
  %v1135 = vpack.c.b16 %v1127, %v1127
  %v1136 = vpack.c.b16 %v1128, %v1128
  %v1137 = vpack.c.b16 %v1129, %v1129
  %v1138 = vpack.c.b16 %v1130, %v1130
  %v1139 = vpack.c.b16 %v1131, %v1131
  %v1140 = vpack.c.b16 %v1132, %v1132
  %1149 = vmatpush.bf16.msra.mxu0 %v1064
  %1150 = vmatpush.bf16.msra.mxu0 %v1063
  %1151 = vmatpush.bf16.msra.mxu0 %v1062
  %1152 = vmatpush.bf16.msra.mxu0 %v1061
  %1153 = vmatpush.bf16.msra.mxu0 %v1060
  %1154 = vmatpush.bf16.msra.mxu0 %v1059
  %1155 = vmatpush.bf16.msra.mxu0 %v1058
  %1156 = vmatpush.bf16.msra.mxu0 %v1057
  %1157 = vmatmul.bf16.gmra.mxu0 %v1133
  %v1158 = vpop.f32.mrf.mxu0
  %v1159 = vadd.f32 0.0, %v1158
  %v1160 = vpop.f32.mrf.mxu0
  %1161 = vdwg.mxu0
  %1162 = vmatpush.bf16.msra.mxu0 %v1072
  %1163 = vmatpush.bf16.msra.mxu0 %v1071
  %1164 = vmatpush.bf16.msra.mxu0 %v1070
  %1165 = vmatpush.bf16.msra.mxu0 %v1069
  %1166 = vmatpush.bf16.msra.mxu0 %v1068
  %1167 = vmatpush.bf16.msra.mxu0 %v1067
  %1168 = vmatpush.bf16.msra.mxu0 %v1066
  %1169 = vmatpush.bf16.msra.mxu0 %v1065
  %1170 = vmatmul.bf16.gmra.mxu0 %v1134
  %v1171 = vpop.f32.mrf.mxu0
  %v1172 = vadd.f32 %v1159, %v1171
  %v1173 = vpop.f32.mrf.mxu0
  %1174 = vdwg.mxu0
  %1175 = vmatpush.bf16.msra.mxu0 %v1080
  %1176 = vmatpush.bf16.msra.mxu0 %v1079
  %1177 = vmatpush.bf16.msra.mxu0 %v1078
  %1178 = vmatpush.bf16.msra.mxu0 %v1077
  %1179 = vmatpush.bf16.msra.mxu0 %v1076
  %1180 = vmatpush.bf16.msra.mxu0 %v1075
  %1181 = vmatpush.bf16.msra.mxu0 %v1074
  %1182 = vmatpush.bf16.msra.mxu0 %v1073
  %1183 = vmatmul.bf16.gmra.mxu0 %v1135
  %v1184 = vpop.f32.mrf.mxu0
  %v1185 = vadd.f32 %v1172, %v1184
  %v1186 = vpop.f32.mrf.mxu0
  %1187 = vdwg.mxu0
  %1188 = vmatpush.bf16.msra.mxu0 %v1088
  %1189 = vmatpush.bf16.msra.mxu0 %v1087
  %1190 = vmatpush.bf16.msra.mxu0 %v1086
  %1191 = vmatpush.bf16.msra.mxu0 %v1085
  %1192 = vmatpush.bf16.msra.mxu0 %v1084
  %1193 = vmatpush.bf16.msra.mxu0 %v1083
  %1194 = vmatpush.bf16.msra.mxu0 %v1082
  %1195 = vmatpush.bf16.msra.mxu0 %v1081
  %1196 = vmatmul.bf16.gmra.mxu0 %v1136
  %v1197 = vpop.f32.mrf.mxu0
  %v1198 = vadd.f32 %v1185, %v1197
  %v1199 = vpop.f32.mrf.mxu0
  %1200 = vdwg.mxu0
  %1201 = vmatpush.bf16.msra.mxu0 %v1096
  %1202 = vmatpush.bf16.msra.mxu0 %v1095
  %1203 = vmatpush.bf16.msra.mxu0 %v1094
  %1204 = vmatpush.bf16.msra.mxu0 %v1093
  %1205 = vmatpush.bf16.msra.mxu0 %v1092
  %1206 = vmatpush.bf16.msra.mxu0 %v1091
  %1207 = vmatpush.bf16.msra.mxu0 %v1090
  %1208 = vmatpush.bf16.msra.mxu0 %v1089
  %1209 = vmatmul.bf16.gmra.mxu0 %v1137
  %v1210 = vpop.f32.mrf.mxu0
  %v1211 = vadd.f32 %v1198, %v1210
  %v1212 = vpop.f32.mrf.mxu0
  %1213 = vdwg.mxu0
  %1214 = vmatpush.bf16.msra.mxu0 %v1104
  %1215 = vmatpush.bf16.msra.mxu0 %v1103
  %1216 = vmatpush.bf16.msra.mxu0 %v1102
  %1217 = vmatpush.bf16.msra.mxu0 %v1101
  %1218 = vmatpush.bf16.msra.mxu0 %v1100
  %1219 = vmatpush.bf16.msra.mxu0 %v1099
  %1220 = vmatpush.bf16.msra.mxu0 %v1098
  %1221 = vmatpush.bf16.msra.mxu0 %v1097
  %1222 = vmatmul.bf16.gmra.mxu0 %v1138
  %v1223 = vpop.f32.mrf.mxu0
  %v1224 = vadd.f32 %v1211, %v1223
  %v1225 = vpop.f32.mrf.mxu0
  %1226 = vdwg.mxu0
  %1227 = vmatpush.bf16.msra.mxu0 %v1112
  %1228 = vmatpush.bf16.msra.mxu0 %v1111
  %1229 = vmatpush.bf16.msra.mxu0 %v1110
  %1230 = vmatpush.bf16.msra.mxu0 %v1109
  %1231 = vmatpush.bf16.msra.mxu0 %v1108
  %1232 = vmatpush.bf16.msra.mxu0 %v1107
  %1233 = vmatpush.bf16.msra.mxu0 %v1106
  %1234 = vmatpush.bf16.msra.mxu0 %v1105
  %1235 = vmatmul.bf16.gmra.mxu0 %v1139
  %v1236 = vpop.f32.mrf.mxu0
  %v1237 = vadd.f32 %v1224, %v1236
  %v1238 = vpop.f32.mrf.mxu0
  %1239 = vdwg.mxu0
  %1240 = vmatpush.bf16.msra.mxu0 %v1120
  %1241 = vmatpush.bf16.msra.mxu0 %v1119
  %1242 = vmatpush.bf16.msra.mxu0 %v1118
  %1243 = vmatpush.bf16.msra.mxu0 %v1117
  %1244 = vmatpush.bf16.msra.mxu0 %v1116
  %1245 = vmatpush.bf16.msra.mxu0 %v1115
  %1246 = vmatpush.bf16.msra.mxu0 %v1114
  %1247 = vmatpush.bf16.msra.mxu0 %v1113
  %1248 = vmatmul.bf16.gmra.mxu0 %v1140
  %v1249 = vpop.f32.mrf.mxu0
  %v1250 = vadd.f32 %v1237, %v1249
  %v1251 = vpop.f32.mrf.mxu0
  %1252 = vdwg.mxu0
  %v1253 = vld [vmem:[%s4] sm:$0xff]
  %v1254 = vlaneseq
  %v1255 = vshrl.u32 %v1254, 7
  %vm1256 = vcmp.lt.s32.totalorder %v1255, 2
  %v1257 = vld [vmem:[%s3] sm:$0xf]
  %v1258 = vld [vmem:[%s3 + $0x4] sm:$0xf]
  %v1259 = vld [vmem:[%s3 + $0x8] sm:$0xf]
  %v1260 = vld [vmem:[%s3 + $0xc] sm:$0xf]
  %v1261 = vld [vmem:[%s3 + $0x10] sm:$0xf]
  %v1262 = vld [vmem:[%s3 + $0x14] sm:$0xf]
  %v1263 = vld [vmem:[%s3 + $0x18] sm:$0xf]
  %v1264 = vld [vmem:[%s3 + $0x1c] sm:$0xf]
  %v1265 = vld [vmem:[%s3 + $0x20] sm:$0xf]
  %v1266 = vld [vmem:[%s3 + $0x24] sm:$0xf]
  %v1267 = vld [vmem:[%s3 + $0x28] sm:$0xf]
  %v1268 = vld [vmem:[%s3 + $0x2c] sm:$0xf]
  %v1269 = vld [vmem:[%s3 + $0x30] sm:$0xf]
  %v1270 = vld [vmem:[%s3 + $0x34] sm:$0xf]
  %v1271 = vld [vmem:[%s3 + $0x38] sm:$0xf]
  %v1272 = vld [vmem:[%s3 + $0x3c] sm:$0xf]
  %v1273 = vpack.c.bf16 %v1250, %v1250
  %v1290 = vunpack.c.l.b16 %v1257
  %v1291 = vunpack.c.l.b16 %v1258
  %v1292 = vunpack.c.l.b16 %v1259
  %v1293 = vunpack.c.l.b16 %v1260
  %v1294 = vunpack.c.l.b16 %v1261
  %v1295 = vunpack.c.l.b16 %v1262
  %v1296 = vunpack.c.l.b16 %v1263
  %v1297 = vunpack.c.l.b16 %v1264
  %v1298 = vunpack.c.l.b16 %v1265
  %v1299 = vunpack.c.l.b16 %v1266
  %v1300 = vunpack.c.l.b16 %v1267
  %v1301 = vunpack.c.l.b16 %v1268
  %v1302 = vunpack.c.l.b16 %v1269
  %v1303 = vunpack.c.l.b16 %v1270
  %v1304 = vunpack.c.l.b16 %v1271
  %v1305 = vunpack.c.l.b16 %v1272
  %v1306 = vpack.c.b16 %v1291, %v1290
  %v1307 = vpack.c.b16 %v1293, %v1292
  %v1308 = vpack.c.b16 %v1295, %v1294
  %v1309 = vpack.c.b16 %v1297, %v1296
  %v1310 = vpack.c.b16 %v1299, %v1298
  %v1311 = vpack.c.b16 %v1301, %v1300
  %v1312 = vpack.c.b16 %v1303, %v1302
  %v1313 = vpack.c.b16 %v1305, %v1304
  %1322 = vmatpush.bf16.msra.mxu0 %v1313
  %1323 = vmatpush.bf16.msra.mxu0 %v1312
  %1324 = vmatpush.bf16.msra.mxu0 %v1311
  %1325 = vmatpush.bf16.msra.mxu0 %v1310
  %1326 = vmatpush.bf16.msra.mxu0 %v1309
  %1327 = vmatpush.bf16.msra.mxu0 %v1308
  %1328 = vmatpush.bf16.msra.mxu0 %v1307
  %1329 = vmatpush.bf16.msra.mxu0 %v1306
  %1330 = vmatmul.bf16.gmra.mxu0 %v1273
  %v1331 = vpop.f32.mrf.mxu0
  %v1332 = vadd.f32 0.0, %v1331
  %v1333 = vpop.f32.mrf.mxu0
  %1334 = vdwg.mxu0
  %vm1335 = vcmask 1041408
  %v1336 = vsel %vm1335, %v1332, 0.0
  %v1337 = vrot.slane %v1336, 4
  %v1338 = vadd.f32 %v1336, %v1337
  %v1339 = vrot.slane %v1338, 2
  %v1340 = vadd.f32 %v1338, %v1339
  %v1341 = vrot.slane %v1340, 1
  %v1342 = vadd.f32 %v1340, %v1341
  %v1343 = vrcp.pop 2.0
  %v1344 = vmul.f32 2.0, %v1343
  %v1345 = vsub.f32 1.0, %v1344
  %v1346 = vmul.f32 %v1343, %v1345
  %v1347 = vadd.f32 %v1343, %v1346
  %vm1348 = vweird.f32 %v1343
  %v1349 = vsel %vm1348, %v1343, %v1347
  %v1350 = vmul.f32 %v1342, %v1349
  %v1352 = vrot.slane %v1332, 2
  %v1354 = vsel %vm1335, %v1352, 0.0
  %v1355 = vrot.slane %v1354, 4
  %v1356 = vadd.f32 %v1354, %v1355
  %v1357 = vrot.slane %v1356, 2
  %v1358 = vadd.f32 %v1356, %v1357
  %v1359 = vrot.slane %v1358, 1
  %v1360 = vadd.f32 %v1358, %v1359
  %v1361 = vmul.f32 %v1360, %v1349
  %v1362 = vsel %vm1256, %v1350, %v1361
  %v1363 = vsub.f32 %v1332, %v1362
  %v1364 = vmul.f32 %v1363, %v1363
  %v1365 = vsel %vm1335, %v1364, 0.0
  %v1366 = vrot.slane %v1365, 4
  %v1367 = vadd.f32 %v1365, %v1366
  %v1368 = vrot.slane %v1367, 2
  %v1369 = vadd.f32 %v1367, %v1368
  %v1370 = vrot.slane %v1369, 1
  %v1371 = vadd.f32 %v1369, %v1370
  %v1372 = vmul.f32 %v1371, %v1349
  %v1374 = vrot.slane %v1364, 2
  %v1376 = vsel %vm1335, %v1374, 0.0
  %v1377 = vrot.slane %v1376, 4
  %v1378 = vadd.f32 %v1376, %v1377
  %v1379 = vrot.slane %v1378, 2
  %v1380 = vadd.f32 %v1378, %v1379
  %v1381 = vrot.slane %v1380, 1
  %v1382 = vadd.f32 %v1380, %v1381
  %v1383 = vmul.f32 %v1382, %v1349
  %v1384 = vsel %vm1256, %v1372, %v1383
  %v1385 = vadd.f32 %v1384, 1e-05
  %v1386 = vrsqrt.pop %v1385
  %v1387 = vmul.f32 %v1386, %v1385
  %v1388 = vmul.f32 %v1387, %v1386
  %v1389 = vmul.f32 0.5, %v1388
  %v1390 = vsub.f32 1.5, %v1389
  %v1391 = vmul.f32 %v1386, %v1390
  %vm1392 = vweird.f32 %v1385
  %vm1393 = vweird.f32 %v1386
  %vm1394 = vmor %vm1392, %vm1393
  %v1395 = vsel %vm1394, %v1386, %v1391
  %v1396 = vmul.f32 %v1363, %v1395
  %v1397 = vperm.slane %v1253, 0
  %v1398 = vmul.f32 %v1396, %v1397
  %v1399 = vperm.slane %v1253, 1
  %v1400 = vadd.f32 %v1398, %v1399
  %v1401 = vmax.f32 %v1400, 0.0
  %s1402 = scalar_lea.vmem %s3, 64
  %v1403 = vld [vmem:[%s1402] sm:$0xf]
  %v1404 = vld [vmem:[%s1402 + $0x4] sm:$0xf]
  %v1405 = vld [vmem:[%s1402 + $0x8] sm:$0xf]
  %v1406 = vld [vmem:[%s1402 + $0xc] sm:$0xf]
  %v1407 = vld [vmem:[%s1402 + $0x10] sm:$0xf]
  %v1408 = vld [vmem:[%s1402 + $0x14] sm:$0xf]
  %v1409 = vld [vmem:[%s1402 + $0x18] sm:$0xf]
  %v1410 = vld [vmem:[%s1402 + $0x1c] sm:$0xf]
  %v1411 = vld [vmem:[%s1402 + $0x20] sm:$0xf]
  %v1412 = vld [vmem:[%s1402 + $0x24] sm:$0xf]
  %v1413 = vld [vmem:[%s1402 + $0x28] sm:$0xf]
  %v1414 = vld [vmem:[%s1402 + $0x2c] sm:$0xf]
  %v1415 = vld [vmem:[%s1402 + $0x30] sm:$0xf]
  %v1416 = vld [vmem:[%s1402 + $0x34] sm:$0xf]
  %v1417 = vld [vmem:[%s1402 + $0x38] sm:$0xf]
  %v1418 = vld [vmem:[%s1402 + $0x3c] sm:$0xf]
  %v1419 = vpack.c.bf16 %v1401, %v1401
  %v1436 = vunpack.c.l.b16 %v1403
  %v1437 = vunpack.c.l.b16 %v1404
  %v1438 = vunpack.c.l.b16 %v1405
  %v1439 = vunpack.c.l.b16 %v1406
  %v1440 = vunpack.c.l.b16 %v1407
  %v1441 = vunpack.c.l.b16 %v1408
  %v1442 = vunpack.c.l.b16 %v1409
  %v1443 = vunpack.c.l.b16 %v1410
  %v1444 = vunpack.c.l.b16 %v1411
  %v1445 = vunpack.c.l.b16 %v1412
  %v1446 = vunpack.c.l.b16 %v1413
  %v1447 = vunpack.c.l.b16 %v1414
  %v1448 = vunpack.c.l.b16 %v1415
  %v1449 = vunpack.c.l.b16 %v1416
  %v1450 = vunpack.c.l.b16 %v1417
  %v1451 = vunpack.c.l.b16 %v1418
  %v1452 = vpack.c.b16 %v1437, %v1436
  %v1453 = vpack.c.b16 %v1439, %v1438
  %v1454 = vpack.c.b16 %v1441, %v1440
  %v1455 = vpack.c.b16 %v1443, %v1442
  %v1456 = vpack.c.b16 %v1445, %v1444
  %v1457 = vpack.c.b16 %v1447, %v1446
  %v1458 = vpack.c.b16 %v1449, %v1448
  %v1459 = vpack.c.b16 %v1451, %v1450
  %1468 = vmatpush.bf16.msra.mxu0 %v1459
  %1469 = vmatpush.bf16.msra.mxu0 %v1458
  %1470 = vmatpush.bf16.msra.mxu0 %v1457
  %1471 = vmatpush.bf16.msra.mxu0 %v1456
  %1472 = vmatpush.bf16.msra.mxu0 %v1455
  %1473 = vmatpush.bf16.msra.mxu0 %v1454
  %1474 = vmatpush.bf16.msra.mxu0 %v1453
  %1475 = vmatpush.bf16.msra.mxu0 %v1452
  %1476 = vmatmul.bf16.gmra.mxu0 %v1419
  %v1477 = vpop.f32.mrf.mxu0
  %v1478 = vadd.f32 0.0, %v1477
  %v1479 = vpop.f32.mrf.mxu0
  %1480 = vdwg.mxu0
  %v1481 = vsel %vm1335, %v1478, 0.0
  %v1482 = vrot.slane %v1481, 4
  %v1483 = vadd.f32 %v1481, %v1482
  %v1484 = vrot.slane %v1483, 2
  %v1485 = vadd.f32 %v1483, %v1484
  %v1486 = vrot.slane %v1485, 1
  %v1487 = vadd.f32 %v1485, %v1486
  %v1488 = vmul.f32 %v1487, %v1349
  %v1490 = vrot.slane %v1478, 2
  %v1492 = vsel %vm1335, %v1490, 0.0
  %v1493 = vrot.slane %v1492, 4
  %v1494 = vadd.f32 %v1492, %v1493
  %v1495 = vrot.slane %v1494, 2
  %v1496 = vadd.f32 %v1494, %v1495
  %v1497 = vrot.slane %v1496, 1
  %v1498 = vadd.f32 %v1496, %v1497
  %v1499 = vmul.f32 %v1498, %v1349
  %v1500 = vsel %vm1256, %v1488, %v1499
  %v1501 = vsub.f32 %v1478, %v1500
  %v1502 = vmul.f32 %v1501, %v1501
  %v1503 = vsel %vm1335, %v1502, 0.0
  %v1504 = vrot.slane %v1503, 4
  %v1505 = vadd.f32 %v1503, %v1504
  %v1506 = vrot.slane %v1505, 2
  %v1507 = vadd.f32 %v1505, %v1506
  %v1508 = vrot.slane %v1507, 1
  %v1509 = vadd.f32 %v1507, %v1508
  %v1510 = vmul.f32 %v1509, %v1349
  %v1512 = vrot.slane %v1502, 2
  %v1514 = vsel %vm1335, %v1512, 0.0
  %v1515 = vrot.slane %v1514, 4
  %v1516 = vadd.f32 %v1514, %v1515
  %v1517 = vrot.slane %v1516, 2
  %v1518 = vadd.f32 %v1516, %v1517
  %v1519 = vrot.slane %v1518, 1
  %v1520 = vadd.f32 %v1518, %v1519
  %v1521 = vmul.f32 %v1520, %v1349
  %v1522 = vsel %vm1256, %v1510, %v1521
  %v1523 = vadd.f32 %v1522, 1e-05
  %v1524 = vrsqrt.pop %v1523
  %v1525 = vmul.f32 %v1524, %v1523
  %v1526 = vmul.f32 %v1525, %v1524
  %v1527 = vmul.f32 0.5, %v1526
  %v1528 = vsub.f32 1.5, %v1527
  %v1529 = vmul.f32 %v1524, %v1528
  %vm1530 = vweird.f32 %v1523
  %vm1531 = vweird.f32 %v1524
  %vm1532 = vmor %vm1530, %vm1531
  %v1533 = vsel %vm1532, %v1524, %v1529
  %v1534 = vmul.f32 %v1501, %v1533
  %s1535 = scalar_lea.vmem %s3, 128
  %v1536 = vld [vmem:[%s1535] sm:$0xf]
  %v1537 = vld [vmem:[%s1535 + $0x4] sm:$0xf]
  %v1538 = vld [vmem:[%s1535 + $0x8] sm:$0xf]
  %v1539 = vld [vmem:[%s1535 + $0xc] sm:$0xf]
  %v1540 = vld [vmem:[%s1535 + $0x10] sm:$0xf]
  %v1541 = vld [vmem:[%s1535 + $0x14] sm:$0xf]
  %v1542 = vld [vmem:[%s1535 + $0x18] sm:$0xf]
  %v1543 = vld [vmem:[%s1535 + $0x1c] sm:$0xf]
  %v1544 = vld [vmem:[%s1535 + $0x20] sm:$0xf]
  %v1545 = vld [vmem:[%s1535 + $0x24] sm:$0xf]
  %v1546 = vld [vmem:[%s1535 + $0x28] sm:$0xf]
  %v1547 = vld [vmem:[%s1535 + $0x2c] sm:$0xf]
  %v1548 = vld [vmem:[%s1535 + $0x30] sm:$0xf]
  %v1549 = vld [vmem:[%s1535 + $0x34] sm:$0xf]
  %v1550 = vld [vmem:[%s1535 + $0x38] sm:$0xf]
  %v1551 = vld [vmem:[%s1535 + $0x3c] sm:$0xf]
  %v1552 = vpack.c.bf16 %v1534, %v1534
  %v1553 = vperm.slane %v1253, 2
  %v1570 = vunpack.c.l.b16 %v1536
  %v1571 = vunpack.c.l.b16 %v1537
  %v1572 = vunpack.c.l.b16 %v1538
  %v1573 = vunpack.c.l.b16 %v1539
  %v1574 = vunpack.c.l.b16 %v1540
  %v1575 = vunpack.c.l.b16 %v1541
  %v1576 = vunpack.c.l.b16 %v1542
  %v1577 = vunpack.c.l.b16 %v1543
  %v1578 = vunpack.c.l.b16 %v1544
  %v1579 = vunpack.c.l.b16 %v1545
  %v1580 = vunpack.c.l.b16 %v1546
  %v1581 = vunpack.c.l.b16 %v1547
  %v1582 = vunpack.c.l.b16 %v1548
  %v1583 = vunpack.c.l.b16 %v1549
  %v1584 = vunpack.c.l.b16 %v1550
  %v1585 = vunpack.c.l.b16 %v1551
  %v1586 = vpack.c.b16 %v1571, %v1570
  %v1587 = vpack.c.b16 %v1573, %v1572
  %v1588 = vpack.c.b16 %v1575, %v1574
  %v1589 = vpack.c.b16 %v1577, %v1576
  %v1590 = vpack.c.b16 %v1579, %v1578
  %v1591 = vpack.c.b16 %v1581, %v1580
  %v1592 = vpack.c.b16 %v1583, %v1582
  %v1593 = vpack.c.b16 %v1585, %v1584
  %1602 = vmatpush.bf16.msra.mxu0 %v1593
  %1603 = vmatpush.bf16.msra.mxu0 %v1592
  %1604 = vmatpush.bf16.msra.mxu0 %v1591
  %1605 = vmatpush.bf16.msra.mxu0 %v1590
  %1606 = vmatpush.bf16.msra.mxu0 %v1589
  %1607 = vmatpush.bf16.msra.mxu0 %v1588
  %1608 = vmatpush.bf16.msra.mxu0 %v1587
  %1609 = vmatpush.bf16.msra.mxu0 %v1586
  %1610 = vmatmul.bf16.gmra.mxu0 %v1552
  %v1611 = vpop.f32.mrf.mxu0
  %v1612 = vadd.f32 %v1553, %v1611
  %v1613 = vpop.f32.mrf.mxu0
  %1614 = vdwg.mxu0
  %v1615 = vsel %vm1335, %v1612, 0.0
  %v1616 = vrot.slane %v1615, 4
  %v1617 = vadd.f32 %v1615, %v1616
  %v1618 = vrot.slane %v1617, 2
  %v1619 = vadd.f32 %v1617, %v1618
  %v1620 = vrot.slane %v1619, 1
  %v1621 = vadd.f32 %v1619, %v1620
  %v1622 = vmul.f32 %v1621, %v1349
  %v1624 = vrot.slane %v1612, 2
  %v1626 = vsel %vm1335, %v1624, 0.0
  %v1627 = vrot.slane %v1626, 4
  %v1628 = vadd.f32 %v1626, %v1627
  %v1629 = vrot.slane %v1628, 2
  %v1630 = vadd.f32 %v1628, %v1629
  %v1631 = vrot.slane %v1630, 1
  %v1632 = vadd.f32 %v1630, %v1631
  %v1633 = vmul.f32 %v1632, %v1349
  %v1634 = vsel %vm1256, %v1622, %v1633
  %v1635 = vsub.f32 %v1612, %v1634
  %v1636 = vmul.f32 %v1635, %v1635
  %v1637 = vsel %vm1335, %v1636, 0.0
  %v1638 = vrot.slane %v1637, 4
  %v1639 = vadd.f32 %v1637, %v1638
  %v1640 = vrot.slane %v1639, 2
  %v1641 = vadd.f32 %v1639, %v1640
  %v1642 = vrot.slane %v1641, 1
  %v1643 = vadd.f32 %v1641, %v1642
  %v1644 = vmul.f32 %v1643, %v1349
  %v1646 = vrot.slane %v1636, 2
  %v1648 = vsel %vm1335, %v1646, 0.0
  %v1649 = vrot.slane %v1648, 4
  %v1650 = vadd.f32 %v1648, %v1649
  %v1651 = vrot.slane %v1650, 2
  %v1652 = vadd.f32 %v1650, %v1651
  %v1653 = vrot.slane %v1652, 1
  %v1654 = vadd.f32 %v1652, %v1653
  %v1655 = vmul.f32 %v1654, %v1349
  %v1656 = vsel %vm1256, %v1644, %v1655
  %v1657 = vadd.f32 %v1656, 1e-05
  %v1658 = vrsqrt.pop %v1657
  %v1659 = vmul.f32 %v1658, %v1657
  %v1660 = vmul.f32 %v1659, %v1658
  %v1661 = vmul.f32 0.5, %v1660
  %v1662 = vsub.f32 1.5, %v1661
  %v1663 = vmul.f32 %v1658, %v1662
  %vm1664 = vweird.f32 %v1657
  %vm1665 = vweird.f32 %v1658
  %vm1666 = vmor %vm1664, %vm1665
  %v1667 = vsel %vm1666, %v1658, %v1663
  %v1668 = vmul.f32 %v1635, %v1667
  %v1669 = vperm.slane %v1253, 3
  %v1670 = vmul.f32 %v1668, %v1669
  %v1671 = vperm.slane %v1253, 4
  %v1672 = vadd.f32 %v1670, %v1671
  %v1673 = vmax.f32 %v1672, 0.0
  %s1674 = scalar_lea.vmem %s3, 192
  %v1675 = vld [vmem:[%s1674] sm:$0xf]
  %v1676 = vld [vmem:[%s1674 + $0x4] sm:$0xf]
  %v1677 = vld [vmem:[%s1674 + $0x8] sm:$0xf]
  %v1678 = vld [vmem:[%s1674 + $0xc] sm:$0xf]
  %v1679 = vld [vmem:[%s1674 + $0x10] sm:$0xf]
  %v1680 = vld [vmem:[%s1674 + $0x14] sm:$0xf]
  %v1681 = vld [vmem:[%s1674 + $0x18] sm:$0xf]
  %v1682 = vld [vmem:[%s1674 + $0x1c] sm:$0xf]
  %v1683 = vld [vmem:[%s1674 + $0x20] sm:$0xf]
  %v1684 = vld [vmem:[%s1674 + $0x24] sm:$0xf]
  %v1685 = vld [vmem:[%s1674 + $0x28] sm:$0xf]
  %v1686 = vld [vmem:[%s1674 + $0x2c] sm:$0xf]
  %v1687 = vld [vmem:[%s1674 + $0x30] sm:$0xf]
  %v1688 = vld [vmem:[%s1674 + $0x34] sm:$0xf]
  %v1689 = vld [vmem:[%s1674 + $0x38] sm:$0xf]
  %v1690 = vld [vmem:[%s1674 + $0x3c] sm:$0xf]
  %v1691 = vpack.c.bf16 %v1673, %v1673
  %v1692 = vperm.slane %v1253, 5
  %v1709 = vunpack.c.l.b16 %v1675
  %v1710 = vunpack.c.l.b16 %v1676
  %v1711 = vunpack.c.l.b16 %v1677
  %v1712 = vunpack.c.l.b16 %v1678
  %v1713 = vunpack.c.l.b16 %v1679
  %v1714 = vunpack.c.l.b16 %v1680
  %v1715 = vunpack.c.l.b16 %v1681
  %v1716 = vunpack.c.l.b16 %v1682
  %v1717 = vunpack.c.l.b16 %v1683
  %v1718 = vunpack.c.l.b16 %v1684
  %v1719 = vunpack.c.l.b16 %v1685
  %v1720 = vunpack.c.l.b16 %v1686
  %v1721 = vunpack.c.l.b16 %v1687
  %v1722 = vunpack.c.l.b16 %v1688
  %v1723 = vunpack.c.l.b16 %v1689
  %v1724 = vunpack.c.l.b16 %v1690
  %v1725 = vpack.c.b16 %v1710, %v1709
  %v1726 = vpack.c.b16 %v1712, %v1711
  %v1727 = vpack.c.b16 %v1714, %v1713
  %v1728 = vpack.c.b16 %v1716, %v1715
  %v1729 = vpack.c.b16 %v1718, %v1717
  %v1730 = vpack.c.b16 %v1720, %v1719
  %v1731 = vpack.c.b16 %v1722, %v1721
  %v1732 = vpack.c.b16 %v1724, %v1723
  %1741 = vmatpush.bf16.msra.mxu0 %v1732
  %1742 = vmatpush.bf16.msra.mxu0 %v1731
  %1743 = vmatpush.bf16.msra.mxu0 %v1730
  %1744 = vmatpush.bf16.msra.mxu0 %v1729
  %1745 = vmatpush.bf16.msra.mxu0 %v1728
  %1746 = vmatpush.bf16.msra.mxu0 %v1727
  %1747 = vmatpush.bf16.msra.mxu0 %v1726
  %1748 = vmatpush.bf16.msra.mxu0 %v1725
  %1749 = vmatmul.bf16.gmra.mxu0 %v1691
  %v1750 = vpop.f32.mrf.mxu0
  %v1751 = vadd.f32 %v1692, %v1750
  %v1752 = vpop.f32.mrf.mxu0
  %1753 = vdwg.mxu0
  %v1755 = vrot.slane %v1534, 6
  %v1758 = vrot.slane %v1751, 6
  %v1760 = vsel %vm1335, %v1751, %v1755
  %vm1761 = vcmask 1043456
  %v1762 = vsel %vm1761, %v1760, %v1758
  %vm1763 = vcmask 1045504
  %v1764 = vsel %vm1763, %v1762, 0.0
  %1765 = vst [vmem:[%s5] sm:$0xff] %v1764
  // Predicated region
  $region22: #{simsiam_forward.1} parent=0 // pred_check
    _
  $region23: #{simsiam_forward.1} parent=0 // pred_check_branch
    %1767 = sbr.rel (0) target = $region25
  $region24: #{simsiam_forward.1} parent=0 // pred_region
    _
  $region25: #{simsiam_forward.1} parent=0 // pred_fallthru
    _
  // Predicated region
  $region26: #{simsiam_forward.1} parent=0 // pred_check
    _
  $region27: #{simsiam_forward.1} parent=0 // pred_check_branch
    %1769 = sbr.rel (0) target = $region29
  $region28: #{simsiam_forward.1} parent=0 // pred_region
    _
  $region29: #{simsiam_forward.1} parent=0 // pred_fallthru
    _

</llo_original>
